<compile_context>
chip_gen: v7x
topology: tpu7x:2x2x1
jax: 0.10.0
libtpu: 0.0.40
codegen_flags: <defaults>
</compile_context>

<pallas_src>
import jax
import jax.numpy as jnp
from jax.experimental import pallas as pl
from jax.experimental.pallas import tpu as pltpu

# Model / problem sizes (small, consistent with the module's usage).
BATCH = 2
SEQ = 8
EMBED = 32
HEADS = 4
HEAD_DIM = EMBED // HEADS            # 8
FFN = 4 * EMBED                      # forward_expansion = 4 -> 128
EPS = 1e-5                           # nn.LayerNorm default eps
SCALE = 1.0 / float(EMBED) ** 0.5    # PyTorch module divides energy by sqrt(embed_size)

TOK = BATCH * SEQ                    # 16 token rows (batch folded into row axis)
GRP = HEADS * BATCH                  # 8 independent (head, batch) attention groups
E3 = 3 * EMBED                       # 96 = lanes of the fused activation / QKV slabs

# Packed misc-slab layout (rows x 128 lanes).
_W1T = 0                             # rows [  0: 32)  w1.T  (EMBED, FFN)
_W2T = _W1T + EMBED                  # rows [ 32:160)  w2.T  (FFN, EMBED)   in cols [0:EMBED]
_WOT = _W2T + FFN                    # rows [160:192)  wo.T  (EMBED, EMBED) in cols [0:EMBED]
_VEC = _WOT + EMBED                  # rows [192:200)  packed small vectors
MISC_ROWS = _VEC + 8                 # 200
MISC_COLS = FFN                      # 128 (lane-dense)

# Rows inside the packed vector block.
_B1, _BO, _LN1W, _LN1B, _B2, _LN2W, _LN2B = 0, 1, 2, 3, 4, 5, 6


def _layernorm(x, w, b):
    mu = jnp.mean(x, axis=-1, keepdims=True)
    var = jnp.mean((x - mu) ** 2, axis=-1, keepdims=True)
    return (x - mu) * jax.lax.rsqrt(var + EPS) * w + b


def transformer_block_kernel(x_ref, wqkv_ref, misc_ref, out_ref):
    f32 = jnp.float32

    x = x_ref[...]                                   # (TOK, 3E) = [value | key | query]
    q_tm = x[:, 2 * EMBED:3 * EMBED]                 # residual query, token-major (TOK, E)

    # Packed weights / vectors (static slices of the single misc slab).
    w1_t = misc_ref[_W1T:_W1T + EMBED, :]            # (E, FFN)
    w2_t = misc_ref[_W2T:_W2T + FFN, 0:EMBED]        # (FFN, E)
    wo_t = misc_ref[_WOT:_WOT + EMBED, 0:EMBED]      # (E, E)
    vec = misc_ref[_VEC:_VEC + 8, :]                 # (8, 128)
    b1   = vec[_B1:_B1 + 1, :FFN]
    bo   = vec[_BO:_BO + 1, :EMBED]
    ln1w = vec[_LN1W:_LN1W + 1, :EMBED]
    ln1b = vec[_LN1B:_LN1B + 1, :EMBED]
    b2   = vec[_B2:_B2 + 1, :EMBED]
    ln2w = vec[_LN2W:_LN2W + 1, :EMBED]
    ln2b = vec[_LN2B:_LN2B + 1, :EMBED]

    # --- fused block-diagonal QKV projection: ONE MXU push (scale pre-folded into Q) ---
    qkv = jnp.dot(x, wqkv_ref[...], preferred_element_type=f32)      # (TOK, 3E)
    vp = qkv[:, 0:EMBED]                                             # (TOK, E)
    kp = qkv[:, EMBED:2 * EMBED]
    qp = qkv[:, 2 * EMBED:3 * EMBED]

    # token-major (b*s, h*d) -> grouped (h*b, s, d): sublane-aligned slices + axis-0 concat
    # (no in-kernel transpose; reshape only splits the leading axis).
    def to_groups(t):
        hm = jnp.concatenate(
            [t[:, h * HEAD_DIM:(h + 1) * HEAD_DIM] for h in range(HEADS)], axis=0)
        return hm.reshape(GRP, SEQ, HEAD_DIM)

    q3 = to_groups(qp)
    k3 = to_groups(kp)
    v3 = to_groups(vp)

    # --- attention, batched over the (head, batch) groups; scores already scaled ---
    s = jnp.einsum('gqd,gkd->gqk', q3, k3, preferred_element_type=f32)   # (GRP, S, S)
    m = jnp.max(s, axis=-1, keepdims=True)
    p = jnp.exp(s - m)
    denom = jnp.sum(p, axis=-1, keepdims=True)
    att = p * pl.reciprocal(denom, approx=True)                          # EUP, not VALU divide
    o3 = jnp.einsum('gqk,gkd->gqd', att, v3, preferred_element_type=f32) # (GRP, S, hd)

    # Head-merge back to token-major (static lane concat), then ONE fc_out matmul.
    o_hm = o3.reshape(HEADS, TOK, HEAD_DIM)          # per-head (TOK, hd) token-major blocks
    o_tm = jnp.concatenate([o_hm[h] for h in range(HEADS)], axis=-1)     # (TOK, E)
    attn = jnp.dot(o_tm, wo_t, preferred_element_type=f32) + bo          # (TOK, E)

    # --- residual + norm1 (dropout is identity in eval) ---
    x1 = _layernorm(attn + q_tm, ln1w, ln1b)

    # --- feed-forward: Linear -> ReLU -> Linear ---
    h1 = jnp.maximum(jnp.dot(x1, w1_t, preferred_element_type=f32) + b1, 0.0)  # (TOK, FFN)
    ff = jnp.dot(h1, w2_t, preferred_element_type=f32) + b2                    # (TOK, E)

    # --- residual + norm2 ---
    out_ref[...] = _layernorm(ff + x1, ln2w, ln2b).astype(out_ref.dtype)


@jax.jit
def transformer_block(value, key, query, params):
    (wv, wk, wq, wo, bo, ln1w, ln1b, w1, b1, w2, b2, ln2w, ln2b) = params

    # 1) Activations: one token-major, lane-dense slab [value | key | query] -> single DMA.
    x_slab = jnp.concatenate([value, key, query], axis=-1).reshape(TOK, E3)

    # 2) Fused block-diagonal QKV weight; softmax scale folded into the Q block.
    eye_h = jnp.eye(HEADS, dtype=jnp.float32)
    wv_bd = jnp.kron(eye_h, wv.T)                    # (E, E) per-head block diagonal
    wk_bd = jnp.kron(eye_h, wk.T)
    wq_bd = jnp.kron(eye_h, wq.T) * SCALE
    z = jnp.zeros((EMBED, EMBED), jnp.float32)
    w_qkv = jnp.concatenate([
        jnp.concatenate([wv_bd, z, z], axis=1),
        jnp.concatenate([z, wk_bd, z], axis=1),
        jnp.concatenate([z, z, wq_bd], axis=1),
    ], axis=0)                                       # (3E, 3E) = (96, 96)

    # 3) Remaining weights / small vectors packed into one 128-lane slab (single concat).
    def pad_cols(a):
        return jnp.pad(a, ((0, 0), (0, MISC_COLS - a.shape[1])))

    misc = jnp.concatenate([
        w1.T,                                        # (EMBED, FFN) -> rows [0:32)
        pad_cols(w2.T),                              # (FFN, EMBED) -> rows [32:160)
        pad_cols(wo.T),                              # (EMBED, EMBED) -> rows [160:192)
        b1.reshape(1, FFN),
        pad_cols(bo.reshape(1, EMBED)),
        pad_cols(ln1w.reshape(1, EMBED)),
        pad_cols(ln1b.reshape(1, EMBED)),
        pad_cols(b2.reshape(1, EMBED)),
        pad_cols(ln2w.reshape(1, EMBED)),
        pad_cols(ln2b.reshape(1, EMBED)),
        jnp.zeros((1, MISC_COLS), jnp.float32),      # pad to 200 rows
    ], axis=0)                                       # (MISC_ROWS, 128)

    out = pl.pallas_call(
        transformer_block_kernel,
        out_shape=jax.ShapeDtypeStruct((TOK, EMBED), jnp.float32),
        grid_spec=pltpu.PrefetchScalarGridSpec(
            num_scalar_prefetch=0,
            grid=(1,),                               # whole problem fits easily in VMEM
            in_specs=[
                pl.BlockSpec((TOK, E3), lambda i: (0, 0)),            # activation slab
                pl.BlockSpec((E3, E3), lambda i: (0, 0)),             # fused QKV weight
                pl.BlockSpec((MISC_ROWS, MISC_COLS), lambda i: (0, 0)),  # packed misc slab
            ],
            out_specs=pl.BlockSpec((TOK, EMBED), lambda i: (0, 0)),
        ),
        compiler_params=pltpu.CompilerParams(dimension_semantics=("arbitrary",)),
    )(x_slab, w_qkv, misc)

    return out.reshape(BATCH, SEQ, EMBED)


def _reference(value, key, query, params):
    """Pure-JAX reference reproducing the PyTorch forward (mask=None, eval mode)."""
    (wv, wk, wq, wo, bo, ln1w, ln1b, w1, b1, w2, b2, ln2w, ln2b) = params
    N = query.shape[0]
    v = value.reshape(N, SEQ, HEADS, HEAD_DIM) @ wv.T
    k = key.reshape(N, SEQ, HEADS, HEAD_DIM) @ wk.T
    q = query.reshape(N, SEQ, HEADS, HEAD_DIM) @ wq.T
    energy = jnp.einsum('nqhd,nkhd->nhqk', q, k)
    att = jax.nn.softmax(energy / jnp.sqrt(jnp.float32(EMBED)), axis=3)
    out = jnp.einsum('nhql,nlhd->nqhd', att, v).reshape(N, SEQ, EMBED)
    attn = out @ wo.T + bo[0]
    x = _layernorm(attn + query, ln1w[0], ln1b[0])
    ff = jnp.maximum(x @ w1.T + b1[0], 0.0) @ w2.T + b2[0]
    return _layernorm(ff + x, ln2w[0], ln2b[0])


def init_params(rng):
    keys = jax.random.split(rng, 8)
    s = 0.1
    wv = jax.random.normal(keys[0], (HEAD_DIM, HEAD_DIM), jnp.float32) * s
    wk = jax.random.normal(keys[1], (HEAD_DIM, HEAD_DIM), jnp.float32) * s
    wq = jax.random.normal(keys[2], (HEAD_DIM, HEAD_DIM), jnp.float32) * s
    wo = jax.random.normal(keys[3], (EMBED, EMBED), jnp.float32) * s
    bo = jax.random.normal(keys[4], (1, EMBED), jnp.float32) * s
    ln1w = jnp.ones((1, EMBED), jnp.float32)
    ln1b = jnp.zeros((1, EMBED), jnp.float32)
    w1 = jax.random.normal(keys[5], (FFN, EMBED), jnp.float32) * s
    b1 = jax.random.normal(keys[6], (1, FFN), jnp.float32) * s
    w2 = jax.random.normal(keys[7], (EMBED, FFN), jnp.float32) * s
    b2 = jnp.zeros((1, EMBED), jnp.float32)
    ln2w = jnp.ones((1, EMBED), jnp.float32)
    ln2b = jnp.zeros((1, EMBED), jnp.float32)
    return (wv, wk, wq, wo, bo, ln1w, ln1b, w1, b1, w2, b2, ln2w, ln2b)


if __name__ == "__main__":
    root = jax.random.PRNGKey(0)
    k_v, k_k, k_q, k_p = jax.random.split(root, 4)
    value = jax.random.normal(k_v, (BATCH, SEQ, EMBED), jnp.float32)
    key = jax.random.normal(k_k, (BATCH, SEQ, EMBED), jnp.float32)
    query = jax.random.normal(k_q, (BATCH, SEQ, EMBED), jnp.float32)
    params = init_params(k_p)

    out = transformer_block(value, key, query, params)
    out = jax.block_until_ready(out)

    ref = _reference(value, key, query, params)
    assert out.shape == (BATCH, SEQ, EMBED)
    # Tolerance 2e-3 because the softmax denominator uses the EUP approximate
    # reciprocal (pl.reciprocal(approx=True), ~2^-12 relative error).
    assert jnp.allclose(out, ref, rtol=2e-3, atol=2e-3), "kernel/reference mismatch"

    print("KERNEL_OK")
</pallas_src>

<mosaic_0001>
module attributes {stable_mosaic.version = 11 : i64} {
  func.func @transformer_block_kernel(%arg0: i32, %arg1: memref<16x96xf32, #tpu.memory_space<vmem>>, %arg2: memref<96x96xf32, #tpu.memory_space<vmem>>, %arg3: memref<200x128xf32, #tpu.memory_space<vmem>>, %arg4: memref<16x32xf32, #tpu.memory_space<vmem>>) attributes {dimension_semantics = [#tpu.dimension_semantics<arbitrary>], iteration_bounds = array<i64: 1>, scalar_prefetch = 0 : i64, scratch_operands = 0 : i64, tpu.core_type = #tpu.core_type<tc>, window_params = [{pipeline_mode = #tpu.pipeline_mode<synchronous>, transform_indices = @transform_0, window_bounds = array<i64: 16, 96>}, {pipeline_mode = #tpu.pipeline_mode<synchronous>, transform_indices = @transform_1, window_bounds = array<i64: 96, 96>}, {pipeline_mode = #tpu.pipeline_mode<synchronous>, transform_indices = @transform_2, window_bounds = array<i64: 200, 128>}, {pipeline_mode = #tpu.pipeline_mode<synchronous>, transform_indices = @transform_3, window_bounds = array<i64: 16, 32>}]} {
    %c0 = arith.constant 0 : index
    %c0_0 = arith.constant 0 : index
    %0 = vector.load %arg1[%c0, %c0_0] : memref<16x96xf32, #tpu.memory_space<vmem>>, vector<16x96xf32>
    %1 = vector.extract_strided_slice %0 {offsets = [0, 64], sizes = [16, 32], strides = [1, 1]} : vector<16x96xf32> to vector<16x32xf32>
    %c0_1 = arith.constant 0 : index
    %c0_2 = arith.constant 0 : index
    %2 = vector.load %arg3[%c0_1, %c0_2] : memref<200x128xf32, #tpu.memory_space<vmem>>, vector<32x128xf32>
    %c32 = arith.constant 32 : index
    %c0_3 = arith.constant 0 : index
    %3 = vector.load %arg3[%c32, %c0_3] : memref<200x128xf32, #tpu.memory_space<vmem>>, vector<128x32xf32>
    %c160 = arith.constant 160 : index
    %c0_4 = arith.constant 0 : index
    %4 = vector.load %arg3[%c160, %c0_4] : memref<200x128xf32, #tpu.memory_space<vmem>>, vector<32x32xf32>
    %c192 = arith.constant 192 : index
    %c0_5 = arith.constant 0 : index
    %5 = vector.load %arg3[%c192, %c0_5] : memref<200x128xf32, #tpu.memory_space<vmem>>, vector<8x128xf32>
    %6 = vector.extract_strided_slice %5 {offsets = [0, 0], sizes = [1, 128], strides = [1, 1]} : vector<8x128xf32> to vector<1x128xf32>
    %7 = vector.extract_strided_slice %5 {offsets = [1, 0], sizes = [1, 32], strides = [1, 1]} : vector<8x128xf32> to vector<1x32xf32>
    %8 = vector.extract_strided_slice %5 {offsets = [2, 0], sizes = [1, 32], strides = [1, 1]} : vector<8x128xf32> to vector<1x32xf32>
    %9 = vector.extract_strided_slice %5 {offsets = [3, 0], sizes = [1, 32], strides = [1, 1]} : vector<8x128xf32> to vector<1x32xf32>
    %10 = vector.extract_strided_slice %5 {offsets = [4, 0], sizes = [1, 32], strides = [1, 1]} : vector<8x128xf32> to vector<1x32xf32>
    %11 = vector.extract_strided_slice %5 {offsets = [5, 0], sizes = [1, 32], strides = [1, 1]} : vector<8x128xf32> to vector<1x32xf32>
    %12 = vector.extract_strided_slice %5 {offsets = [6, 0], sizes = [1, 32], strides = [1, 1]} : vector<8x128xf32> to vector<1x32xf32>
    %c0_6 = arith.constant 0 : index
    %c0_7 = arith.constant 0 : index
    %13 = vector.load %arg2[%c0_6, %c0_7] : memref<96x96xf32, #tpu.memory_space<vmem>>, vector<96x96xf32>
    %cst = arith.constant dense<0.000000e+00> : vector<16x96xf32>
    %14 = tpu.matmul %0, %13, %cst {dimension_numbers = #tpu.dot_dimension_numbers<[1], [0], [0], [1], [0, 0, 1, 1], [], []>} : vector<16x96xf32>, vector<96x96xf32>, vector<16x96xf32> -> vector<16x96xf32>
    %15 = vector.extract_strided_slice %14 {offsets = [0, 0], sizes = [16, 32], strides = [1, 1]} : vector<16x96xf32> to vector<16x32xf32>
    %16 = vector.extract_strided_slice %14 {offsets = [0, 32], sizes = [16, 32], strides = [1, 1]} : vector<16x96xf32> to vector<16x32xf32>
    %17 = vector.extract_strided_slice %14 {offsets = [0, 64], sizes = [16, 32], strides = [1, 1]} : vector<16x96xf32> to vector<16x32xf32>
    %18 = vector.extract_strided_slice %17 {offsets = [0, 0], sizes = [16, 8], strides = [1, 1]} : vector<16x32xf32> to vector<16x8xf32>
    %19 = vector.extract_strided_slice %17 {offsets = [0, 8], sizes = [16, 8], strides = [1, 1]} : vector<16x32xf32> to vector<16x8xf32>
    %20 = vector.extract_strided_slice %17 {offsets = [0, 16], sizes = [16, 8], strides = [1, 1]} : vector<16x32xf32> to vector<16x8xf32>
    %21 = vector.extract_strided_slice %17 {offsets = [0, 24], sizes = [16, 8], strides = [1, 1]} : vector<16x32xf32> to vector<16x8xf32>
    %22 = tpu.concatenate %18, %19, %20, %21 in 0 : vector<16x8xf32>, vector<16x8xf32>, vector<16x8xf32>, vector<16x8xf32> -> vector<64x8xf32>
    %23 = vector.shape_cast %22 : vector<64x8xf32> to vector<8x8x8xf32>
    %24 = vector.extract_strided_slice %16 {offsets = [0, 0], sizes = [16, 8], strides = [1, 1]} : vector<16x32xf32> to vector<16x8xf32>
    %25 = vector.extract_strided_slice %16 {offsets = [0, 8], sizes = [16, 8], strides = [1, 1]} : vector<16x32xf32> to vector<16x8xf32>
    %26 = vector.extract_strided_slice %16 {offsets = [0, 16], sizes = [16, 8], strides = [1, 1]} : vector<16x32xf32> to vector<16x8xf32>
    %27 = vector.extract_strided_slice %16 {offsets = [0, 24], sizes = [16, 8], strides = [1, 1]} : vector<16x32xf32> to vector<16x8xf32>
    %28 = tpu.concatenate %24, %25, %26, %27 in 0 : vector<16x8xf32>, vector<16x8xf32>, vector<16x8xf32>, vector<16x8xf32> -> vector<64x8xf32>
    %29 = vector.shape_cast %28 : vector<64x8xf32> to vector<8x8x8xf32>
    %30 = vector.extract_strided_slice %15 {offsets = [0, 0], sizes = [16, 8], strides = [1, 1]} : vector<16x32xf32> to vector<16x8xf32>
    %31 = vector.extract_strided_slice %15 {offsets = [0, 8], sizes = [16, 8], strides = [1, 1]} : vector<16x32xf32> to vector<16x8xf32>
    %32 = vector.extract_strided_slice %15 {offsets = [0, 16], sizes = [16, 8], strides = [1, 1]} : vector<16x32xf32> to vector<16x8xf32>
    %33 = vector.extract_strided_slice %15 {offsets = [0, 24], sizes = [16, 8], strides = [1, 1]} : vector<16x32xf32> to vector<16x8xf32>
    %34 = tpu.concatenate %30, %31, %32, %33 in 0 : vector<16x8xf32>, vector<16x8xf32>, vector<16x8xf32>, vector<16x8xf32> -> vector<64x8xf32>
    %35 = vector.shape_cast %34 : vector<64x8xf32> to vector<8x8x8xf32>
    "tpu.trace_start"() <{level = 10 : i32, message = "gqd,gkd->gqk"}> : () -> ()
    %cst_8 = arith.constant dense<0.000000e+00> : vector<8x8x8xf32>
    %36 = tpu.matmul %23, %29, %cst_8 {dimension_numbers = #tpu.dot_dimension_numbers<[2], [2], [1], [1], [0, 0, 0, 1, 1, 1], [0], [0]>} : vector<8x8x8xf32>, vector<8x8x8xf32>, vector<8x8x8xf32> -> vector<8x8x8xf32>
    "tpu.trace_stop"() : () -> ()
    %cst_9 = arith.constant dense<0xFF800000> : vector<8x8xf32>
    %37 = vector.multi_reduction <maximumf>, %36, %cst_9 [2] : vector<8x8x8xf32> to vector<8x8xf32>
    %38 = vector.shape_cast %37 : vector<8x8xf32> to vector<8x8x1xf32>
    %39 = vector.broadcast %38 : vector<8x8x1xf32> to vector<8x8x8xf32>
    %40 = arith.subf %36, %39 : vector<8x8x8xf32>
    %41 = math.exp %40 : vector<8x8x8xf32>
    %cst_10 = arith.constant dense<0.000000e+00> : vector<8x8xf32>
    %42 = vector.multi_reduction <add>, %41, %cst_10 [2] : vector<8x8x8xf32> to vector<8x8xf32>
    %43 = vector.shape_cast %42 : vector<8x8xf32> to vector<8x8x1xf32>
    %44 = tpu.reciprocal %43 {approx = true} : vector<8x8x1xf32> -> vector<8x8x1xf32>
    %45 = vector.broadcast %44 : vector<8x8x1xf32> to vector<8x8x8xf32>
    %46 = arith.mulf %41, %45 : vector<8x8x8xf32>
    "tpu.trace_start"() <{level = 10 : i32, message = "gqk,gkd->gqd"}> : () -> ()
    %cst_11 = arith.constant dense<0.000000e+00> : vector<8x8x8xf32>
    %47 = tpu.matmul %46, %35, %cst_11 {dimension_numbers = #tpu.dot_dimension_numbers<[2], [1], [1], [2], [0, 0, 0, 1, 1, 2], [0], [0]>} : vector<8x8x8xf32>, vector<8x8x8xf32>, vector<8x8x8xf32> -> vector<8x8x8xf32>
    "tpu.trace_stop"() : () -> ()
    %48 = vector.shape_cast %47 : vector<8x8x8xf32> to vector<4x16x8xf32>
    %49 = vector.extract_strided_slice %48 {offsets = [0, 0, 0], sizes = [1, 16, 8], strides = [1, 1, 1]} : vector<4x16x8xf32> to vector<1x16x8xf32>
    %50 = vector.shape_cast %49 : vector<1x16x8xf32> to vector<16x8xf32>
    %51 = vector.extract_strided_slice %48 {offsets = [1, 0, 0], sizes = [1, 16, 8], strides = [1, 1, 1]} : vector<4x16x8xf32> to vector<1x16x8xf32>
    %52 = vector.shape_cast %51 : vector<1x16x8xf32> to vector<16x8xf32>
    %53 = vector.extract_strided_slice %48 {offsets = [2, 0, 0], sizes = [1, 16, 8], strides = [1, 1, 1]} : vector<4x16x8xf32> to vector<1x16x8xf32>
    %54 = vector.shape_cast %53 : vector<1x16x8xf32> to vector<16x8xf32>
    %55 = vector.extract_strided_slice %48 {offsets = [3, 0, 0], sizes = [1, 16, 8], strides = [1, 1, 1]} : vector<4x16x8xf32> to vector<1x16x8xf32>
    %56 = vector.shape_cast %55 : vector<1x16x8xf32> to vector<16x8xf32>
    %57 = tpu.concatenate %50, %52, %54, %56 in 1 : vector<16x8xf32>, vector<16x8xf32>, vector<16x8xf32>, vector<16x8xf32> -> vector<16x32xf32>
    %cst_12 = arith.constant dense<0.000000e+00> : vector<16x32xf32>
    %58 = tpu.matmul %57, %4, %cst_12 {dimension_numbers = #tpu.dot_dimension_numbers<[1], [0], [0], [1], [0, 0, 1, 1], [], []>} : vector<16x32xf32>, vector<32x32xf32>, vector<16x32xf32> -> vector<16x32xf32>
    %59 = vector.broadcast %7 : vector<1x32xf32> to vector<16x32xf32>
    %60 = arith.addf %58, %59 : vector<16x32xf32>
    %61 = arith.addf %60, %1 : vector<16x32xf32>
    %cst_13 = arith.constant dense<0.000000e+00> : vector<16xf32>
    %62 = vector.multi_reduction <add>, %61, %cst_13 [1] : vector<16x32xf32> to vector<16xf32>
    %63 = vector.shape_cast %62 : vector<16xf32> to vector<16x1xf32>
    %cst_14 = arith.constant 3.200000e+01 : f32
    %64 = vector.broadcast %cst_14 : f32 to vector<16x1xf32>
    %65 = arith.divf %63, %64 : vector<16x1xf32>
    %66 = vector.broadcast %65 : vector<16x1xf32> to vector<16x32xf32>
    %67 = arith.subf %61, %66 : vector<16x32xf32>
    %68 = arith.mulf %67, %67 : vector<16x32xf32>
    %cst_15 = arith.constant dense<0.000000e+00> : vector<16xf32>
    %69 = vector.multi_reduction <add>, %68, %cst_15 [1] : vector<16x32xf32> to vector<16xf32>
    %70 = vector.shape_cast %69 : vector<16xf32> to vector<16x1xf32>
    %cst_16 = arith.constant 3.200000e+01 : f32
    %71 = vector.broadcast %cst_16 : f32 to vector<16x1xf32>
    %72 = arith.divf %70, %71 : vector<16x1xf32>
    %73 = vector.broadcast %65 : vector<16x1xf32> to vector<16x32xf32>
    %74 = arith.subf %61, %73 : vector<16x32xf32>
    %cst_17 = arith.constant 9.99999974E-6 : f32
    %75 = vector.broadcast %cst_17 : f32 to vector<16x1xf32>
    %76 = arith.addf %72, %75 : vector<16x1xf32>
    %77 = math.rsqrt %76 : vector<16x1xf32>
    %78 = vector.broadcast %77 : vector<16x1xf32> to vector<16x32xf32>
    %79 = arith.mulf %74, %78 : vector<16x32xf32>
    %80 = vector.broadcast %8 : vector<1x32xf32> to vector<16x32xf32>
    %81 = arith.mulf %79, %80 : vector<16x32xf32>
    %82 = vector.broadcast %9 : vector<1x32xf32> to vector<16x32xf32>
    %83 = arith.addf %81, %82 : vector<16x32xf32>
    %cst_18 = arith.constant dense<0.000000e+00> : vector<16x128xf32>
    %84 = tpu.matmul %83, %2, %cst_18 {dimension_numbers = #tpu.dot_dimension_numbers<[1], [0], [0], [1], [0, 0, 1, 1], [], []>} : vector<16x32xf32>, vector<32x128xf32>, vector<16x128xf32> -> vector<16x128xf32>
    %85 = vector.broadcast %6 : vector<1x128xf32> to vector<16x128xf32>
    %86 = arith.addf %84, %85 : vector<16x128xf32>
    %cst_19 = arith.constant 0.000000e+00 : f32
    %87 = vector.broadcast %cst_19 : f32 to vector<16x128xf32>
    %88 = arith.maximumf %86, %87 : vector<16x128xf32>
    %cst_20 = arith.constant dense<0.000000e+00> : vector<16x32xf32>
    %89 = tpu.matmul %88, %3, %cst_20 {dimension_numbers = #tpu.dot_dimension_numbers<[1], [0], [0], [1], [0, 0, 1, 1], [], []>} : vector<16x128xf32>, vector<128x32xf32>, vector<16x32xf32> -> vector<16x32xf32>
    %90 = vector.broadcast %10 : vector<1x32xf32> to vector<16x32xf32>
    %91 = arith.addf %89, %90 : vector<16x32xf32>
    %92 = arith.addf %91, %83 : vector<16x32xf32>
    %cst_21 = arith.constant dense<0.000000e+00> : vector<16xf32>
    %93 = vector.multi_reduction <add>, %92, %cst_21 [1] : vector<16x32xf32> to vector<16xf32>
    %94 = vector.shape_cast %93 : vector<16xf32> to vector<16x1xf32>
    %cst_22 = arith.constant 3.200000e+01 : f32
    %95 = vector.broadcast %cst_22 : f32 to vector<16x1xf32>
    %96 = arith.divf %94, %95 : vector<16x1xf32>
    %97 = vector.broadcast %96 : vector<16x1xf32> to vector<16x32xf32>
    %98 = arith.subf %92, %97 : vector<16x32xf32>
    %99 = arith.mulf %98, %98 : vector<16x32xf32>
    %cst_23 = arith.constant dense<0.000000e+00> : vector<16xf32>
    %100 = vector.multi_reduction <add>, %99, %cst_23 [1] : vector<16x32xf32> to vector<16xf32>
    %101 = vector.shape_cast %100 : vector<16xf32> to vector<16x1xf32>
    %cst_24 = arith.constant 3.200000e+01 : f32
    %102 = vector.broadcast %cst_24 : f32 to vector<16x1xf32>
    %103 = arith.divf %101, %102 : vector<16x1xf32>
    %104 = vector.broadcast %96 : vector<16x1xf32> to vector<16x32xf32>
    %105 = arith.subf %92, %104 : vector<16x32xf32>
    %cst_25 = arith.constant 9.99999974E-6 : f32
    %106 = vector.broadcast %cst_25 : f32 to vector<16x1xf32>
    %107 = arith.addf %103, %106 : vector<16x1xf32>
    %108 = math.rsqrt %107 : vector<16x1xf32>
    %109 = vector.broadcast %108 : vector<16x1xf32> to vector<16x32xf32>
    %110 = arith.mulf %105, %109 : vector<16x32xf32>
    %111 = vector.broadcast %11 : vector<1x32xf32> to vector<16x32xf32>
    %112 = arith.mulf %110, %111 : vector<16x32xf32>
    %113 = vector.broadcast %12 : vector<1x32xf32> to vector<16x32xf32>
    %114 = arith.addf %112, %113 : vector<16x32xf32>
    %c0_26 = arith.constant 0 : index
    %c0_27 = arith.constant 0 : index
    %115 = vector.load %arg4[%c0_26, %c0_27] : memref<16x32xf32, #tpu.memory_space<vmem>>, vector<16x32xf32>
    tpu.vector_store %arg4[%c0_26, %c0_27], %114 {strides = array<i32>} : memref<16x32xf32, #tpu.memory_space<vmem>>, vector<16x32xf32>,
    return
  }
  func.func @transform_0(%arg0: i32) -> (i32, i32) {
    %c0_i32 = arith.constant 0 : i32
    %c0_i32_0 = arith.constant 0 : i32
    %c0_i32_1 = arith.constant 0 : i32
    return %c0_i32, %c0_i32_0 : i32, i32
  }
  func.func @transform_1(%arg0: i32) -> (i32, i32) {
    %c0_i32 = arith.constant 0 : i32
    %c0_i32_0 = arith.constant 0 : i32
    %c0_i32_1 = arith.constant 0 : i32
    return %c0_i32, %c0_i32_0 : i32, i32
  }
  func.func @transform_2(%arg0: i32) -> (i32, i32) {
    %c0_i32 = arith.constant 0 : i32
    %c0_i32_0 = arith.constant 0 : i32
    %c0_i32_1 = arith.constant 0 : i32
    return %c0_i32, %c0_i32_0 : i32, i32
  }
  func.func @transform_3(%arg0: i32) -> (i32, i32) {
    %c0_i32 = arith.constant 0 : i32
    %c0_i32_0 = arith.constant 0 : i32
    %c0_i32_1 = arith.constant 0 : i32
    return %c0_i32, %c0_i32_0 : i32, i32
  }
}

</mosaic_0001>

<llo_original>
// kernel: transformer_block.1
$region0: #{transformer_block.1}
  #allocation0 [shape = 'u32[]', space=smem, size = 0x4, offset = 0x4, fixed_abs, tag = 'smem constant byte address 0x4 - core index']
  #allocation1 [shape = 'u32[144,128]{1,0:T(1,128)}', space=vmem, size = 0x12000, scoped, tag = 'internal scratch']
  %s0 = inlined_call_operand.vmem [shape: f32[16,96], index: 0, kind: input, shape index: {}]
  %s1 = inlined_call_operand.vmem [shape: f32[96,96], index: 1, kind: input, shape index: {}]
  %s2 = inlined_call_operand.vmem [shape: f32[200,128], index: 2, kind: input, shape index: {}]
  %s3 = inlined_call_operand.hbm [shape: f32[16,32], index: 3, kind: output, shape index: {}]
  %s4 = sld [smem:[#allocation0]]
  $region22: #{transformer_block.1} parent=0
    _
  %s6 = ssub.s32 1, %s4
  %s7 = scalar_select 0, %s6, %s4
  $region1: #{transformer_block.1} parent=0
    #allocation2 [shape = 'u8[8192]{0}', space=vmem, size = 0x2000, scoped, tag = 'output window, operand 0, single buffered']
    #allocation3 [shape = 's32[1]{0}', space=sflag, size = 0x4, scoped, tag = 'scoped memory for transformer_block.1']
    %8 = vsyncpa [#allocation3], 0
    // Predicated region
    $region2: #{transformer_block.1} parent=1 // pred_check
      _
    $region3: #{transformer_block.1} parent=1 // pred_check_branch
      %10 = sbr.rel (0) target = $region5
    $region4: #{transformer_block.1} parent=1 // pred_region
      _
    $region5: #{transformer_block.1} parent=1 // pred_fallthru
      _
    // Predicated region
    $region6: #{transformer_block.1} parent=1 // pred_check
      _
    $region7: #{transformer_block.1} parent=1 // pred_check_branch
      %12 = sbr.rel (0) target = $region9
    $region8: #{transformer_block.1} parent=1 // pred_region
      _
    $region9: #{transformer_block.1} parent=1 // pred_fallthru
      _
    // Predicated region
    $region10: #{transformer_block.1} parent=1 // pred_check
      _
    $region11: #{transformer_block.1} parent=1 // pred_check_branch
      %14 = sbr.rel (0) target = $region13
    $region12: #{transformer_block.1} parent=1 // pred_region
      _
    $region13: #{transformer_block.1} parent=1 // pred_fallthru
      _
    %v15 = vld [vmem:[%s0] sm:$0xff]
    %v16 = vld [vmem:[%s0 + $0x8] sm:$0xff]
    %v17 = vld [vmem:[%s2] sm:$0xff]
    %v18 = vld [vmem:[%s2 + $0x8] sm:$0xff]
    %v19 = vld [vmem:[%s2 + $0x10] sm:$0xff]
    %v20 = vld [vmem:[%s2 + $0x18] sm:$0xff]
    %v21 = vld [vmem:[%s2 + $0x20] sm:$0xff]
    %v22 = vld [vmem:[%s2 + $0x28] sm:$0xff]
    %v23 = vld [vmem:[%s2 + $0x30] sm:$0xff]
    %v24 = vld [vmem:[%s2 + $0x38] sm:$0xff]
    %v25 = vld [vmem:[%s2 + $0x40] sm:$0xff]
    %v26 = vld [vmem:[%s2 + $0x48] sm:$0xff]
    %v27 = vld [vmem:[%s2 + $0x50] sm:$0xff]
    %v28 = vld [vmem:[%s2 + $0x58] sm:$0xff]
    %v29 = vld [vmem:[%s2 + $0x60] sm:$0xff]
    %v30 = vld [vmem:[%s2 + $0x68] sm:$0xff]
    %v31 = vld [vmem:[%s2 + $0x70] sm:$0xff]
    %v32 = vld [vmem:[%s2 + $0x78] sm:$0xff]
    %v33 = vld [vmem:[%s2 + $0x80] sm:$0xff]
    %v34 = vld [vmem:[%s2 + $0x88] sm:$0xff]
    %v35 = vld [vmem:[%s2 + $0x90] sm:$0xff]
    %v36 = vld [vmem:[%s2 + $0x98] sm:$0xff]
    %v37 = vld [vmem:[%s2 + $0xa0] sm:$0xff]
    %v38 = vld [vmem:[%s2 + $0xa8] sm:$0xff]
    %v39 = vld [vmem:[%s2 + $0xb0] sm:$0xff]
    %v40 = vld [vmem:[%s2 + $0xb8] sm:$0xff]
    %v41 = vld [vmem:[%s2 + $0xc0] sm:$0xff]
    %v42 = vld [vmem:[%s1] sm:$0xff]
    %v43 = vld [vmem:[%s1 + $0x8] sm:$0xff]
    %v44 = vld [vmem:[%s1 + $0x10] sm:$0xff]
    %v45 = vld [vmem:[%s1 + $0x18] sm:$0xff]
    %v46 = vld [vmem:[%s1 + $0x20] sm:$0xff]
    %v47 = vld [vmem:[%s1 + $0x28] sm:$0xff]
    %v48 = vld [vmem:[%s1 + $0x30] sm:$0xff]
    %v49 = vld [vmem:[%s1 + $0x38] sm:$0xff]
    %v50 = vld [vmem:[%s1 + $0x40] sm:$0xff]
    %v51 = vld [vmem:[%s1 + $0x48] sm:$0xff]
    %v52 = vld [vmem:[%s1 + $0x50] sm:$0xff]
    %v53 = vld [vmem:[%s1 + $0x58] sm:$0xff]
    %vm54 = vcmask 785408
    %v56 = vsel %vm54, %v15, 0
    %v59 = vsel %vm54, %v16, 0
    %61 = vmatprep.subr.mxu0 0.0
    %62 = vmatpush1.msra.mxu0 %v42
    %63 = vmatprep.subr.mxu0 0.0
    %64 = vmatpush1.msra.mxu0 %v43
    %65 = vmatprep.subr.mxu0 0.0
    %66 = vmatpush1.msra.mxu0 %v44
    %67 = vmatprep.subr.mxu0 0.0
    %68 = vmatpush1.msra.mxu0 %v45
    %69 = vmatprep.subr.mxu0 0.0
    %70 = vmatpush1.msra.mxu0 %v46
    %71 = vmatprep.subr.mxu0 0.0
    %72 = vmatpush1.msra.mxu0 %v47
    %73 = vmatprep.subr.mxu0 0.0
    %74 = vmatpush1.msra.mxu0 %v48
    %75 = vmatprep.subr.mxu0 0.0
    %76 = vmatpush1.msra.mxu0 %v49
    %77 = vmatprep.subr.mxu0 0.0
    %78 = vmatpush1.msra.mxu0 %v50
    %79 = vmatprep.subr.mxu0 0.0
    %80 = vmatpush1.msra.mxu0 %v51
    %81 = vmatprep.subr.mxu0 0.0
    %82 = vmatpush1.msra.mxu0 %v52
    %83 = vmatprep.subr.mxu0 0.0
    %84 = vmatpush1.msra.mxu0 %v53
    %85 = vmatprep.subr.mxu0 0.0
    %86 = vmatpush1.msra.mxu0 0.0
    %87 = vmatprep.subr.mxu0 0.0
    %88 = vmatpush1.msra.mxu0 0.0
    %89 = vmatprep.subr.mxu0 0.0
    %90 = vmatpush1.msra.mxu0 0.0
    %91 = vmatprep.subr.mxu0 0.0
    %92 = vmatpush1.msra.mxu0 0.0
    %93 = vmatprep.subr.mxu0 0.0
    %94 = vmatpush1.msra.mxu0 0.0
    %95 = vmatprep.subr.mxu0 0.0
    %96 = vmatpush1.msra.mxu0 0.0
    %97 = vmatprep.subr.mxu0 0.0
    %98 = vmatpush1.msra.mxu0 0.0
    %99 = vmatprep.subr.mxu0 0.0
    %100 = vmatpush1.msra.mxu0 0.0
    %101 = vmatprep.subr.mxu0 0.0
    %102 = vmatpush1.msra.mxu0 0.0
    %103 = vmatprep.subr.mxu0 0.0
    %104 = vmatpush1.msra.mxu0 0.0
    %105 = vmatprep.subr.mxu0 0.0
    %106 = vmatpush1.msra.mxu0 0.0
    %107 = vmatprep.subr.mxu0 0.0
    %108 = vmatpush1.msra.mxu0 0.0
    %109 = vmatprep.subr.mxu0 0.0
    %110 = vmatpush1.msra.mxu0 0.0
    %111 = vmatprep.subr.mxu0 0.0
    %112 = vmatpush1.msra.mxu0 0.0
    %113 = vmatprep.subr.mxu0 0.0
    %114 = vmatpush1.msra.mxu0 0.0
    %115 = vmatprep.subr.mxu0 0.0
    %116 = vmatpush1.msra.mxu0 0.0
    %117 = vmatprep.subr.mxu0 0.0
    %118 = vmatpush1.msra.mxu0 0.0
    %119 = vmatprep.subr.mxu0 0.0
    %120 = vmatpush1.msra.mxu0 0.0
    %121 = vmatprep.subr.mxu0 0.0
    %122 = vmatpush1.msra.mxu0 0.0
    %123 = vmatprep.subr.mxu0 0.0
    %124 = vmatpush1.msra.mxu0 0.0
    %125 = vmatprep.mubr.f32.mxu0 0.0
    %126 = vmatmul.mubr.f32.gmra.mrb[0].mxu0 %v56
    %v127 = vpop.f32.mrb[0].mxu0
    %v128 = vadd.f32 0.0, %v127
    %v129 = vpop.f32.mrb[0].mxu0
    %130 = vmatprep.mubr.f32.mxu0 0.0
    %131 = vmatmul.mubr.f32.gmra.mrb[0].mxu0 %v59
    %v132 = vpop.f32.mrb[0].mxu0
    %v133 = vadd.f32 0.0, %v132
    %v134 = vpop.f32.mrb[0].mxu0
    %135 = vdwg.mxu0
    %138 = vrot.lane.b32.xlu0 %v128, 120
    %v139 = vpop.permute.xlu0 %138
    %140 = vrot.lane.b32.xlu0 %v133, 120
    %v141 = vpop.permute.xlu0 %140
    %142 = vrot.lane.b32.xlu0 %v128, 112
    %v143 = vpop.permute.xlu0 %142
    %144 = vrot.lane.b32.xlu0 %v133, 112
    %v145 = vpop.permute.xlu0 %144
    %146 = vrot.lane.b32.xlu0 %v128, 104
    %v147 = vpop.permute.xlu0 %146
    %148 = vrot.lane.b32.xlu0 %v133, 104
    %v149 = vpop.permute.xlu0 %148
    %156 = vrot.lane.b32.xlu0 %v128, 64
    %v157 = vpop.permute.xlu0 %156
    %158 = vrot.lane.b32.xlu0 %v128, 96
    %v159 = vpop.permute.xlu0 %158
    %vm160 = vcmask 64512
    %v161 = vsel %vm160, %v157, 0
    %v163 = vsel %vm160, %v159, 0
    %165 = vmatprep.subr.mxu0 0.0
    %166 = vmatpush1.xpose.msra.mxu0 %v163
    %167 = vmatprep.subr.mxu0 0.0
    %168 = vmatpush1.xpose.msra.mxu0 0.0
    %169 = vmatprep.subr.mxu0 0.0
    %170 = vmatpush1.xpose.msra.mxu0 0.0
    %171 = vmatprep.subr.mxu0 0.0
    %172 = vmatpush1.xpose.msra.mxu0 0.0
    %173 = vmatprep.subr.mxu0 0.0
    %174 = vmatpush1.xpose.msra.mxu0 0.0
    %175 = vmatprep.subr.mxu0 0.0
    %176 = vmatpush1.xpose.msra.mxu0 0.0
    %177 = vmatprep.subr.mxu0 0.0
    %178 = vmatpush1.xpose.msra.mxu0 0.0
    %179 = vmatprep.subr.mxu0 0.0
    %180 = vmatpush1.xpose.msra.mxu0 0.0
    %181 = vmatprep.subr.mxu0 0.0
    %182 = vmatpush1.xpose.msra.mxu0 0.0
    %183 = vmatprep.subr.mxu0 0.0
    %184 = vmatpush1.xpose.msra.mxu0 0.0
    %185 = vmatprep.subr.mxu0 0.0
    %186 = vmatpush1.xpose.msra.mxu0 0.0
    %187 = vmatprep.subr.mxu0 0.0
    %188 = vmatpush1.xpose.msra.mxu0 0.0
    %189 = vmatprep.subr.mxu0 0.0
    %190 = vmatpush1.xpose.msra.mxu0 0.0
    %191 = vmatprep.subr.mxu0 0.0
    %192 = vmatpush1.xpose.msra.mxu0 0.0
    %193 = vmatprep.subr.mxu0 0.0
    %194 = vmatpush1.xpose.msra.mxu0 0.0
    %195 = vmatprep.subr.mxu0 0.0
    %196 = vmatpush1.xpose.msra.mxu0 0.0
    %197 = vmatprep.subr.mxu0 0.0
    %198 = vmatpush1.xpose.msra.mxu0 0.0
    %199 = vmatprep.subr.mxu0 0.0
    %200 = vmatpush1.xpose.msra.mxu0 0.0
    %201 = vmatprep.subr.mxu0 0.0
    %202 = vmatpush1.xpose.msra.mxu0 0.0
    %203 = vmatprep.subr.mxu0 0.0
    %204 = vmatpush1.xpose.msra.mxu0 0.0
    %205 = vmatprep.subr.mxu0 0.0
    %206 = vmatpush1.xpose.msra.mxu0 0.0
    %207 = vmatprep.subr.mxu0 0.0
    %208 = vmatpush1.xpose.msra.mxu0 0.0
    %209 = vmatprep.subr.mxu0 0.0
    %210 = vmatpush1.xpose.msra.mxu0 0.0
    %211 = vmatprep.subr.mxu0 0.0
    %212 = vmatpush1.xpose.msra.mxu0 0.0
    %213 = vmatprep.subr.mxu0 0.0
    %214 = vmatpush1.xpose.msra.mxu0 0.0
    %215 = vmatprep.subr.mxu0 0.0
    %216 = vmatpush1.xpose.msra.mxu0 0.0
    %217 = vmatprep.subr.mxu0 0.0
    %218 = vmatpush1.xpose.msra.mxu0 0.0
    %219 = vmatprep.subr.mxu0 0.0
    %220 = vmatpush1.xpose.msra.mxu0 0.0
    %221 = vmatprep.subr.mxu0 0.0
    %222 = vmatpush1.xpose.msra.mxu0 0.0
    %223 = vmatprep.subr.mxu0 0.0
    %224 = vmatpush1.xpose.msra.mxu0 0.0
    %225 = vmatprep.subr.mxu0 0.0
    %226 = vmatpush1.xpose.msra.mxu0 0.0
    %227 = vmatprep.subr.mxu0 0.0
    %228 = vmatpush1.xpose.msra.mxu0 0.0
    %229 = vmatprep.mubr.f32.mxu0 0.0
    %230 = vmatmul.mubr.f32.gmra.mrb[0].mxu0 %v161
    %v231 = vpop.f32.mrb[0].mxu0
    %v232 = vadd.f32 0.0, %v231
    %v233 = vpop.f32.mrb[0].mxu0
    %234 = vdwg.mxu0
    %235 = vrot.lane.b32.xlu0 %v133, 64
    %v236 = vpop.permute.xlu0 %235
    %237 = vrot.lane.b32.xlu0 %v133, 96
    %v238 = vpop.permute.xlu0 %237
    %v239 = vsel %vm160, %v236, 0
    %v241 = vsel %vm160, %v238, 0
    %243 = vmatprep.subr.mxu0 0.0
    %244 = vmatpush1.xpose.msra.mxu0 %v241
    %245 = vmatprep.subr.mxu0 0.0
    %246 = vmatpush1.xpose.msra.mxu0 0.0
    %247 = vmatprep.subr.mxu0 0.0
    %248 = vmatpush1.xpose.msra.mxu0 0.0
    %249 = vmatprep.subr.mxu0 0.0
    %250 = vmatpush1.xpose.msra.mxu0 0.0
    %251 = vmatprep.subr.mxu0 0.0
    %252 = vmatpush1.xpose.msra.mxu0 0.0
    %253 = vmatprep.subr.mxu0 0.0
    %254 = vmatpush1.xpose.msra.mxu0 0.0
    %255 = vmatprep.subr.mxu0 0.0
    %256 = vmatpush1.xpose.msra.mxu0 0.0
    %257 = vmatprep.subr.mxu0 0.0
    %258 = vmatpush1.xpose.msra.mxu0 0.0
    %259 = vmatprep.subr.mxu0 0.0
    %260 = vmatpush1.xpose.msra.mxu0 0.0
    %261 = vmatprep.subr.mxu0 0.0
    %262 = vmatpush1.xpose.msra.mxu0 0.0
    %263 = vmatprep.subr.mxu0 0.0
    %264 = vmatpush1.xpose.msra.mxu0 0.0
    %265 = vmatprep.subr.mxu0 0.0
    %266 = vmatpush1.xpose.msra.mxu0 0.0
    %267 = vmatprep.subr.mxu0 0.0
    %268 = vmatpush1.xpose.msra.mxu0 0.0
    %269 = vmatprep.subr.mxu0 0.0
    %270 = vmatpush1.xpose.msra.mxu0 0.0
    %271 = vmatprep.subr.mxu0 0.0
    %272 = vmatpush1.xpose.msra.mxu0 0.0
    %273 = vmatprep.subr.mxu0 0.0
    %274 = vmatpush1.xpose.msra.mxu0 0.0
    %275 = vmatprep.subr.mxu0 0.0
    %276 = vmatpush1.xpose.msra.mxu0 0.0
    %277 = vmatprep.subr.mxu0 0.0
    %278 = vmatpush1.xpose.msra.mxu0 0.0
    %279 = vmatprep.subr.mxu0 0.0
    %280 = vmatpush1.xpose.msra.mxu0 0.0
    %281 = vmatprep.subr.mxu0 0.0
    %282 = vmatpush1.xpose.msra.mxu0 0.0
    %283 = vmatprep.subr.mxu0 0.0
    %284 = vmatpush1.xpose.msra.mxu0 0.0
    %285 = vmatprep.subr.mxu0 0.0
    %286 = vmatpush1.xpose.msra.mxu0 0.0
    %287 = vmatprep.subr.mxu0 0.0
    %288 = vmatpush1.xpose.msra.mxu0 0.0
    %289 = vmatprep.subr.mxu0 0.0
    %290 = vmatpush1.xpose.msra.mxu0 0.0
    %291 = vmatprep.subr.mxu0 0.0
    %292 = vmatpush1.xpose.msra.mxu0 0.0
    %293 = vmatprep.subr.mxu0 0.0
    %294 = vmatpush1.xpose.msra.mxu0 0.0
    %295 = vmatprep.subr.mxu0 0.0
    %296 = vmatpush1.xpose.msra.mxu0 0.0
    %297 = vmatprep.subr.mxu0 0.0
    %298 = vmatpush1.xpose.msra.mxu0 0.0
    %299 = vmatprep.subr.mxu0 0.0
    %300 = vmatpush1.xpose.msra.mxu0 0.0
    %301 = vmatprep.subr.mxu0 0.0
    %302 = vmatpush1.xpose.msra.mxu0 0.0
    %303 = vmatprep.subr.mxu0 0.0
    %304 = vmatpush1.xpose.msra.mxu0 0.0
    %305 = vmatprep.subr.mxu0 0.0
    %306 = vmatpush1.xpose.msra.mxu0 0.0
    %307 = vmatprep.mubr.f32.mxu0 0.0
    %308 = vmatmul.mubr.f32.gmra.mrb[0].mxu0 %v239
    %v309 = vpop.f32.mrb[0].mxu0
    %v310 = vadd.f32 0.0, %v309
    %v311 = vpop.f32.mrb[0].mxu0
    %312 = vdwg.mxu0
    %313 = vrot.lane.b32.xlu0 %v139, 64
    %v314 = vpop.permute.xlu0 %313
    %315 = vrot.lane.b32.xlu0 %v139, 96
    %v316 = vpop.permute.xlu0 %315
    %v317 = vsel %vm160, %v314, 0
    %v319 = vsel %vm160, %v316, 0
    %321 = vmatprep.subr.mxu0 0.0
    %322 = vmatpush1.xpose.msra.mxu0 %v319
    %323 = vmatprep.subr.mxu0 0.0
    %324 = vmatpush1.xpose.msra.mxu0 0.0
    %325 = vmatprep.subr.mxu0 0.0
    %326 = vmatpush1.xpose.msra.mxu0 0.0
    %327 = vmatprep.subr.mxu0 0.0
    %328 = vmatpush1.xpose.msra.mxu0 0.0
    %329 = vmatprep.subr.mxu0 0.0
    %330 = vmatpush1.xpose.msra.mxu0 0.0
    %331 = vmatprep.subr.mxu0 0.0
    %332 = vmatpush1.xpose.msra.mxu0 0.0
    %333 = vmatprep.subr.mxu0 0.0
    %334 = vmatpush1.xpose.msra.mxu0 0.0
    %335 = vmatprep.subr.mxu0 0.0
    %336 = vmatpush1.xpose.msra.mxu0 0.0
    %337 = vmatprep.subr.mxu0 0.0
    %338 = vmatpush1.xpose.msra.mxu0 0.0
    %339 = vmatprep.subr.mxu0 0.0
    %340 = vmatpush1.xpose.msra.mxu0 0.0
    %341 = vmatprep.subr.mxu0 0.0
    %342 = vmatpush1.xpose.msra.mxu0 0.0
    %343 = vmatprep.subr.mxu0 0.0
    %344 = vmatpush1.xpose.msra.mxu0 0.0
    %345 = vmatprep.subr.mxu0 0.0
    %346 = vmatpush1.xpose.msra.mxu0 0.0
    %347 = vmatprep.subr.mxu0 0.0
    %348 = vmatpush1.xpose.msra.mxu0 0.0
    %349 = vmatprep.subr.mxu0 0.0
    %350 = vmatpush1.xpose.msra.mxu0 0.0
    %351 = vmatprep.subr.mxu0 0.0
    %352 = vmatpush1.xpose.msra.mxu0 0.0
    %353 = vmatprep.subr.mxu0 0.0
    %354 = vmatpush1.xpose.msra.mxu0 0.0
    %355 = vmatprep.subr.mxu0 0.0
    %356 = vmatpush1.xpose.msra.mxu0 0.0
    %357 = vmatprep.subr.mxu0 0.0
    %358 = vmatpush1.xpose.msra.mxu0 0.0
    %359 = vmatprep.subr.mxu0 0.0
    %360 = vmatpush1.xpose.msra.mxu0 0.0
    %361 = vmatprep.subr.mxu0 0.0
    %362 = vmatpush1.xpose.msra.mxu0 0.0
    %363 = vmatprep.subr.mxu0 0.0
    %364 = vmatpush1.xpose.msra.mxu0 0.0
    %365 = vmatprep.subr.mxu0 0.0
    %366 = vmatpush1.xpose.msra.mxu0 0.0
    %367 = vmatprep.subr.mxu0 0.0
    %368 = vmatpush1.xpose.msra.mxu0 0.0
    %369 = vmatprep.subr.mxu0 0.0
    %370 = vmatpush1.xpose.msra.mxu0 0.0
    %371 = vmatprep.subr.mxu0 0.0
    %372 = vmatpush1.xpose.msra.mxu0 0.0
    %373 = vmatprep.subr.mxu0 0.0
    %374 = vmatpush1.xpose.msra.mxu0 0.0
    %375 = vmatprep.subr.mxu0 0.0
    %376 = vmatpush1.xpose.msra.mxu0 0.0
    %377 = vmatprep.subr.mxu0 0.0
    %378 = vmatpush1.xpose.msra.mxu0 0.0
    %379 = vmatprep.subr.mxu0 0.0
    %380 = vmatpush1.xpose.msra.mxu0 0.0
    %381 = vmatprep.subr.mxu0 0.0
    %382 = vmatpush1.xpose.msra.mxu0 0.0
    %383 = vmatprep.subr.mxu0 0.0
    %384 = vmatpush1.xpose.msra.mxu0 0.0
    %385 = vmatprep.mubr.f32.mxu0 0.0
    %386 = vmatmul.mubr.f32.gmra.mrb[0].mxu0 %v317
    %v387 = vpop.f32.mrb[0].mxu0
    %v388 = vadd.f32 0.0, %v387
    %v389 = vpop.f32.mrb[0].mxu0
    %390 = vdwg.mxu0
    %391 = vrot.lane.b32.xlu0 %v141, 64
    %v392 = vpop.permute.xlu0 %391
    %393 = vrot.lane.b32.xlu0 %v141, 96
    %v394 = vpop.permute.xlu0 %393
    %v395 = vsel %vm160, %v392, 0
    %v397 = vsel %vm160, %v394, 0
    %399 = vmatprep.subr.mxu0 0.0
    %400 = vmatpush1.xpose.msra.mxu0 %v397
    %401 = vmatprep.subr.mxu0 0.0
    %402 = vmatpush1.xpose.msra.mxu0 0.0
    %403 = vmatprep.subr.mxu0 0.0
    %404 = vmatpush1.xpose.msra.mxu0 0.0
    %405 = vmatprep.subr.mxu0 0.0
    %406 = vmatpush1.xpose.msra.mxu0 0.0
    %407 = vmatprep.subr.mxu0 0.0
    %408 = vmatpush1.xpose.msra.mxu0 0.0
    %409 = vmatprep.subr.mxu0 0.0
    %410 = vmatpush1.xpose.msra.mxu0 0.0
    %411 = vmatprep.subr.mxu0 0.0
    %412 = vmatpush1.xpose.msra.mxu0 0.0
    %413 = vmatprep.subr.mxu0 0.0
    %414 = vmatpush1.xpose.msra.mxu0 0.0
    %415 = vmatprep.subr.mxu0 0.0
    %416 = vmatpush1.xpose.msra.mxu0 0.0
    %417 = vmatprep.subr.mxu0 0.0
    %418 = vmatpush1.xpose.msra.mxu0 0.0
    %419 = vmatprep.subr.mxu0 0.0
    %420 = vmatpush1.xpose.msra.mxu0 0.0
    %421 = vmatprep.subr.mxu0 0.0
    %422 = vmatpush1.xpose.msra.mxu0 0.0
    %423 = vmatprep.subr.mxu0 0.0
    %424 = vmatpush1.xpose.msra.mxu0 0.0
    %425 = vmatprep.subr.mxu0 0.0
    %426 = vmatpush1.xpose.msra.mxu0 0.0
    %427 = vmatprep.subr.mxu0 0.0
    %428 = vmatpush1.xpose.msra.mxu0 0.0
    %429 = vmatprep.subr.mxu0 0.0
    %430 = vmatpush1.xpose.msra.mxu0 0.0
    %431 = vmatprep.subr.mxu0 0.0
    %432 = vmatpush1.xpose.msra.mxu0 0.0
    %433 = vmatprep.subr.mxu0 0.0
    %434 = vmatpush1.xpose.msra.mxu0 0.0
    %435 = vmatprep.subr.mxu0 0.0
    %436 = vmatpush1.xpose.msra.mxu0 0.0
    %437 = vmatprep.subr.mxu0 0.0
    %438 = vmatpush1.xpose.msra.mxu0 0.0
    %439 = vmatprep.subr.mxu0 0.0
    %440 = vmatpush1.xpose.msra.mxu0 0.0
    %441 = vmatprep.subr.mxu0 0.0
    %442 = vmatpush1.xpose.msra.mxu0 0.0
    %443 = vmatprep.subr.mxu0 0.0
    %444 = vmatpush1.xpose.msra.mxu0 0.0
    %445 = vmatprep.subr.mxu0 0.0
    %446 = vmatpush1.xpose.msra.mxu0 0.0
    %447 = vmatprep.subr.mxu0 0.0
    %448 = vmatpush1.xpose.msra.mxu0 0.0
    %449 = vmatprep.subr.mxu0 0.0
    %450 = vmatpush1.xpose.msra.mxu0 0.0
    %451 = vmatprep.subr.mxu0 0.0
    %452 = vmatpush1.xpose.msra.mxu0 0.0
    %453 = vmatprep.subr.mxu0 0.0
    %454 = vmatpush1.xpose.msra.mxu0 0.0
    %455 = vmatprep.subr.mxu0 0.0
    %456 = vmatpush1.xpose.msra.mxu0 0.0
    %457 = vmatprep.subr.mxu0 0.0
    %458 = vmatpush1.xpose.msra.mxu0 0.0
    %459 = vmatprep.subr.mxu0 0.0
    %460 = vmatpush1.xpose.msra.mxu0 0.0
    %461 = vmatprep.subr.mxu0 0.0
    %462 = vmatpush1.xpose.msra.mxu0 0.0
    %463 = vmatprep.mubr.f32.mxu0 0.0
    %464 = vmatmul.mubr.f32.gmra.mrb[0].mxu0 %v395
    %v465 = vpop.f32.mrb[0].mxu0
    %v466 = vadd.f32 0.0, %v465
    %v467 = vpop.f32.mrb[0].mxu0
    %468 = vdwg.mxu0
    %469 = vrot.lane.b32.xlu0 %v143, 64
    %v470 = vpop.permute.xlu0 %469
    %471 = vrot.lane.b32.xlu0 %v143, 96
    %v472 = vpop.permute.xlu0 %471
    %v473 = vsel %vm160, %v470, 0
    %v475 = vsel %vm160, %v472, 0
    %477 = vmatprep.subr.mxu0 0.0
    %478 = vmatpush1.xpose.msra.mxu0 %v475
    %479 = vmatprep.subr.mxu0 0.0
    %480 = vmatpush1.xpose.msra.mxu0 0.0
    %481 = vmatprep.subr.mxu0 0.0
    %482 = vmatpush1.xpose.msra.mxu0 0.0
    %483 = vmatprep.subr.mxu0 0.0
    %484 = vmatpush1.xpose.msra.mxu0 0.0
    %485 = vmatprep.subr.mxu0 0.0
    %486 = vmatpush1.xpose.msra.mxu0 0.0
    %487 = vmatprep.subr.mxu0 0.0
    %488 = vmatpush1.xpose.msra.mxu0 0.0
    %489 = vmatprep.subr.mxu0 0.0
    %490 = vmatpush1.xpose.msra.mxu0 0.0
    %491 = vmatprep.subr.mxu0 0.0
    %492 = vmatpush1.xpose.msra.mxu0 0.0
    %493 = vmatprep.subr.mxu0 0.0
    %494 = vmatpush1.xpose.msra.mxu0 0.0
    %495 = vmatprep.subr.mxu0 0.0
    %496 = vmatpush1.xpose.msra.mxu0 0.0
    %497 = vmatprep.subr.mxu0 0.0
    %498 = vmatpush1.xpose.msra.mxu0 0.0
    %499 = vmatprep.subr.mxu0 0.0
    %500 = vmatpush1.xpose.msra.mxu0 0.0
    %501 = vmatprep.subr.mxu0 0.0
    %502 = vmatpush1.xpose.msra.mxu0 0.0
    %503 = vmatprep.subr.mxu0 0.0
    %504 = vmatpush1.xpose.msra.mxu0 0.0
    %505 = vmatprep.subr.mxu0 0.0
    %506 = vmatpush1.xpose.msra.mxu0 0.0
    %507 = vmatprep.subr.mxu0 0.0
    %508 = vmatpush1.xpose.msra.mxu0 0.0
    %509 = vmatprep.subr.mxu0 0.0
    %510 = vmatpush1.xpose.msra.mxu0 0.0
    %511 = vmatprep.subr.mxu0 0.0
    %512 = vmatpush1.xpose.msra.mxu0 0.0
    %513 = vmatprep.subr.mxu0 0.0
    %514 = vmatpush1.xpose.msra.mxu0 0.0
    %515 = vmatprep.subr.mxu0 0.0
    %516 = vmatpush1.xpose.msra.mxu0 0.0
    %517 = vmatprep.subr.mxu0 0.0
    %518 = vmatpush1.xpose.msra.mxu0 0.0
    %519 = vmatprep.subr.mxu0 0.0
    %520 = vmatpush1.xpose.msra.mxu0 0.0
    %521 = vmatprep.subr.mxu0 0.0
    %522 = vmatpush1.xpose.msra.mxu0 0.0
    %523 = vmatprep.subr.mxu0 0.0
    %524 = vmatpush1.xpose.msra.mxu0 0.0
    %525 = vmatprep.subr.mxu0 0.0
    %526 = vmatpush1.xpose.msra.mxu0 0.0
    %527 = vmatprep.subr.mxu0 0.0
    %528 = vmatpush1.xpose.msra.mxu0 0.0
    %529 = vmatprep.subr.mxu0 0.0
    %530 = vmatpush1.xpose.msra.mxu0 0.0
    %531 = vmatprep.subr.mxu0 0.0
    %532 = vmatpush1.xpose.msra.mxu0 0.0
    %533 = vmatprep.subr.mxu0 0.0
    %534 = vmatpush1.xpose.msra.mxu0 0.0
    %535 = vmatprep.subr.mxu0 0.0
    %536 = vmatpush1.xpose.msra.mxu0 0.0
    %537 = vmatprep.subr.mxu0 0.0
    %538 = vmatpush1.xpose.msra.mxu0 0.0
    %539 = vmatprep.subr.mxu0 0.0
    %540 = vmatpush1.xpose.msra.mxu0 0.0
    %541 = vmatprep.mubr.f32.mxu0 0.0
    %542 = vmatmul.mubr.f32.gmra.mrb[0].mxu0 %v473
    %v543 = vpop.f32.mrb[0].mxu0
    %v544 = vadd.f32 0.0, %v543
    %v545 = vpop.f32.mrb[0].mxu0
    %546 = vdwg.mxu0
    %547 = vrot.lane.b32.xlu0 %v145, 64
    %v548 = vpop.permute.xlu0 %547
    %549 = vrot.lane.b32.xlu0 %v145, 96
    %v550 = vpop.permute.xlu0 %549
    %v551 = vsel %vm160, %v548, 0
    %v553 = vsel %vm160, %v550, 0
    %555 = vmatprep.subr.mxu0 0.0
    %556 = vmatpush1.xpose.msra.mxu0 %v553
    %557 = vmatprep.subr.mxu0 0.0
    %558 = vmatpush1.xpose.msra.mxu0 0.0
    %559 = vmatprep.subr.mxu0 0.0
    %560 = vmatpush1.xpose.msra.mxu0 0.0
    %561 = vmatprep.subr.mxu0 0.0
    %562 = vmatpush1.xpose.msra.mxu0 0.0
    %563 = vmatprep.subr.mxu0 0.0
    %564 = vmatpush1.xpose.msra.mxu0 0.0
    %565 = vmatprep.subr.mxu0 0.0
    %566 = vmatpush1.xpose.msra.mxu0 0.0
    %567 = vmatprep.subr.mxu0 0.0
    %568 = vmatpush1.xpose.msra.mxu0 0.0
    %569 = vmatprep.subr.mxu0 0.0
    %570 = vmatpush1.xpose.msra.mxu0 0.0
    %571 = vmatprep.subr.mxu0 0.0
    %572 = vmatpush1.xpose.msra.mxu0 0.0
    %573 = vmatprep.subr.mxu0 0.0
    %574 = vmatpush1.xpose.msra.mxu0 0.0
    %575 = vmatprep.subr.mxu0 0.0
    %576 = vmatpush1.xpose.msra.mxu0 0.0
    %577 = vmatprep.subr.mxu0 0.0
    %578 = vmatpush1.xpose.msra.mxu0 0.0
    %579 = vmatprep.subr.mxu0 0.0
    %580 = vmatpush1.xpose.msra.mxu0 0.0
    %581 = vmatprep.subr.mxu0 0.0
    %582 = vmatpush1.xpose.msra.mxu0 0.0
    %583 = vmatprep.subr.mxu0 0.0
    %584 = vmatpush1.xpose.msra.mxu0 0.0
    %585 = vmatprep.subr.mxu0 0.0
    %586 = vmatpush1.xpose.msra.mxu0 0.0
    %587 = vmatprep.subr.mxu0 0.0
    %588 = vmatpush1.xpose.msra.mxu0 0.0
    %589 = vmatprep.subr.mxu0 0.0
    %590 = vmatpush1.xpose.msra.mxu0 0.0
    %591 = vmatprep.subr.mxu0 0.0
    %592 = vmatpush1.xpose.msra.mxu0 0.0
    %593 = vmatprep.subr.mxu0 0.0
    %594 = vmatpush1.xpose.msra.mxu0 0.0
    %595 = vmatprep.subr.mxu0 0.0
    %596 = vmatpush1.xpose.msra.mxu0 0.0
    %597 = vmatprep.subr.mxu0 0.0
    %598 = vmatpush1.xpose.msra.mxu0 0.0
    %599 = vmatprep.subr.mxu0 0.0
    %600 = vmatpush1.xpose.msra.mxu0 0.0
    %601 = vmatprep.subr.mxu0 0.0
    %602 = vmatpush1.xpose.msra.mxu0 0.0
    %603 = vmatprep.subr.mxu0 0.0
    %604 = vmatpush1.xpose.msra.mxu0 0.0
    %605 = vmatprep.subr.mxu0 0.0
    %606 = vmatpush1.xpose.msra.mxu0 0.0
    %607 = vmatprep.subr.mxu0 0.0
    %608 = vmatpush1.xpose.msra.mxu0 0.0
    %609 = vmatprep.subr.mxu0 0.0
    %610 = vmatpush1.xpose.msra.mxu0 0.0
    %611 = vmatprep.subr.mxu0 0.0
    %612 = vmatpush1.xpose.msra.mxu0 0.0
    %613 = vmatprep.subr.mxu0 0.0
    %614 = vmatpush1.xpose.msra.mxu0 0.0
    %615 = vmatprep.subr.mxu0 0.0
    %616 = vmatpush1.xpose.msra.mxu0 0.0
    %617 = vmatprep.subr.mxu0 0.0
    %618 = vmatpush1.xpose.msra.mxu0 0.0
    %619 = vmatprep.mubr.f32.mxu0 0.0
    %620 = vmatmul.mubr.f32.gmra.mrb[0].mxu0 %v551
    %v621 = vpop.f32.mrb[0].mxu0
    %v622 = vadd.f32 0.0, %v621
    %v623 = vpop.f32.mrb[0].mxu0
    %624 = vdwg.mxu0
    %625 = vrot.lane.b32.xlu0 %v147, 64
    %v626 = vpop.permute.xlu0 %625
    %627 = vrot.lane.b32.xlu0 %v147, 96
    %v628 = vpop.permute.xlu0 %627
    %v629 = vsel %vm160, %v626, 0
    %v631 = vsel %vm160, %v628, 0
    %633 = vmatprep.subr.mxu0 0.0
    %634 = vmatpush1.xpose.msra.mxu0 %v631
    %635 = vmatprep.subr.mxu0 0.0
    %636 = vmatpush1.xpose.msra.mxu0 0.0
    %637 = vmatprep.subr.mxu0 0.0
    %638 = vmatpush1.xpose.msra.mxu0 0.0
    %639 = vmatprep.subr.mxu0 0.0
    %640 = vmatpush1.xpose.msra.mxu0 0.0
    %641 = vmatprep.subr.mxu0 0.0
    %642 = vmatpush1.xpose.msra.mxu0 0.0
    %643 = vmatprep.subr.mxu0 0.0
    %644 = vmatpush1.xpose.msra.mxu0 0.0
    %645 = vmatprep.subr.mxu0 0.0
    %646 = vmatpush1.xpose.msra.mxu0 0.0
    %647 = vmatprep.subr.mxu0 0.0
    %648 = vmatpush1.xpose.msra.mxu0 0.0
    %649 = vmatprep.subr.mxu0 0.0
    %650 = vmatpush1.xpose.msra.mxu0 0.0
    %651 = vmatprep.subr.mxu0 0.0
    %652 = vmatpush1.xpose.msra.mxu0 0.0
    %653 = vmatprep.subr.mxu0 0.0
    %654 = vmatpush1.xpose.msra.mxu0 0.0
    %655 = vmatprep.subr.mxu0 0.0
    %656 = vmatpush1.xpose.msra.mxu0 0.0
    %657 = vmatprep.subr.mxu0 0.0
    %658 = vmatpush1.xpose.msra.mxu0 0.0
    %659 = vmatprep.subr.mxu0 0.0
    %660 = vmatpush1.xpose.msra.mxu0 0.0
    %661 = vmatprep.subr.mxu0 0.0
    %662 = vmatpush1.xpose.msra.mxu0 0.0
    %663 = vmatprep.subr.mxu0 0.0
    %664 = vmatpush1.xpose.msra.mxu0 0.0
    %665 = vmatprep.subr.mxu0 0.0
    %666 = vmatpush1.xpose.msra.mxu0 0.0
    %667 = vmatprep.subr.mxu0 0.0
    %668 = vmatpush1.xpose.msra.mxu0 0.0
    %669 = vmatprep.subr.mxu0 0.0
    %670 = vmatpush1.xpose.msra.mxu0 0.0
    %671 = vmatprep.subr.mxu0 0.0
    %672 = vmatpush1.xpose.msra.mxu0 0.0
    %673 = vmatprep.subr.mxu0 0.0
    %674 = vmatpush1.xpose.msra.mxu0 0.0
    %675 = vmatprep.subr.mxu0 0.0
    %676 = vmatpush1.xpose.msra.mxu0 0.0
    %677 = vmatprep.subr.mxu0 0.0
    %678 = vmatpush1.xpose.msra.mxu0 0.0
    %679 = vmatprep.subr.mxu0 0.0
    %680 = vmatpush1.xpose.msra.mxu0 0.0
    %681 = vmatprep.subr.mxu0 0.0
    %682 = vmatpush1.xpose.msra.mxu0 0.0
    %683 = vmatprep.subr.mxu0 0.0
    %684 = vmatpush1.xpose.msra.mxu0 0.0
    %685 = vmatprep.subr.mxu0 0.0
    %686 = vmatpush1.xpose.msra.mxu0 0.0
    %687 = vmatprep.subr.mxu0 0.0
    %688 = vmatpush1.xpose.msra.mxu0 0.0
    %689 = vmatprep.subr.mxu0 0.0
    %690 = vmatpush1.xpose.msra.mxu0 0.0
    %691 = vmatprep.subr.mxu0 0.0
    %692 = vmatpush1.xpose.msra.mxu0 0.0
    %693 = vmatprep.subr.mxu0 0.0
    %694 = vmatpush1.xpose.msra.mxu0 0.0
    %695 = vmatprep.subr.mxu0 0.0
    %696 = vmatpush1.xpose.msra.mxu0 0.0
    %697 = vmatprep.mubr.f32.mxu0 0.0
    %698 = vmatmul.mubr.f32.gmra.mrb[0].mxu0 %v629
    %v699 = vpop.f32.mrb[0].mxu0
    %v700 = vadd.f32 0.0, %v699
    %v701 = vpop.f32.mrb[0].mxu0
    %702 = vdwg.mxu0
    %703 = vrot.lane.b32.xlu0 %v149, 64
    %v704 = vpop.permute.xlu0 %703
    %705 = vrot.lane.b32.xlu0 %v149, 96
    %v706 = vpop.permute.xlu0 %705
    %v707 = vsel %vm160, %v704, 0
    %v709 = vsel %vm160, %v706, 0
    %711 = vmatprep.subr.mxu0 0.0
    %712 = vmatpush1.xpose.msra.mxu0 %v709
    %713 = vmatprep.subr.mxu0 0.0
    %714 = vmatpush1.xpose.msra.mxu0 0.0
    %715 = vmatprep.subr.mxu0 0.0
    %716 = vmatpush1.xpose.msra.mxu0 0.0
    %717 = vmatprep.subr.mxu0 0.0
    %718 = vmatpush1.xpose.msra.mxu0 0.0
    %719 = vmatprep.subr.mxu0 0.0
    %720 = vmatpush1.xpose.msra.mxu0 0.0
    %721 = vmatprep.subr.mxu0 0.0
    %722 = vmatpush1.xpose.msra.mxu0 0.0
    %723 = vmatprep.subr.mxu0 0.0
    %724 = vmatpush1.xpose.msra.mxu0 0.0
    %725 = vmatprep.subr.mxu0 0.0
    %726 = vmatpush1.xpose.msra.mxu0 0.0
    %727 = vmatprep.subr.mxu0 0.0
    %728 = vmatpush1.xpose.msra.mxu0 0.0
    %729 = vmatprep.subr.mxu0 0.0
    %730 = vmatpush1.xpose.msra.mxu0 0.0
    %731 = vmatprep.subr.mxu0 0.0
    %732 = vmatpush1.xpose.msra.mxu0 0.0
    %733 = vmatprep.subr.mxu0 0.0
    %734 = vmatpush1.xpose.msra.mxu0 0.0
    %735 = vmatprep.subr.mxu0 0.0
    %736 = vmatpush1.xpose.msra.mxu0 0.0
    %737 = vmatprep.subr.mxu0 0.0
    %738 = vmatpush1.xpose.msra.mxu0 0.0
    %739 = vmatprep.subr.mxu0 0.0
    %740 = vmatpush1.xpose.msra.mxu0 0.0
    %741 = vmatprep.subr.mxu0 0.0
    %742 = vmatpush1.xpose.msra.mxu0 0.0
    %743 = vmatprep.subr.mxu0 0.0
    %744 = vmatpush1.xpose.msra.mxu0 0.0
    %745 = vmatprep.subr.mxu0 0.0
    %746 = vmatpush1.xpose.msra.mxu0 0.0
    %747 = vmatprep.subr.mxu0 0.0
    %748 = vmatpush1.xpose.msra.mxu0 0.0
    %749 = vmatprep.subr.mxu0 0.0
    %750 = vmatpush1.xpose.msra.mxu0 0.0
    %751 = vmatprep.subr.mxu0 0.0
    %752 = vmatpush1.xpose.msra.mxu0 0.0
    %753 = vmatprep.subr.mxu0 0.0
    %754 = vmatpush1.xpose.msra.mxu0 0.0
    %755 = vmatprep.subr.mxu0 0.0
    %756 = vmatpush1.xpose.msra.mxu0 0.0
    %757 = vmatprep.subr.mxu0 0.0
    %758 = vmatpush1.xpose.msra.mxu0 0.0
    %759 = vmatprep.subr.mxu0 0.0
    %760 = vmatpush1.xpose.msra.mxu0 0.0
    %761 = vmatprep.subr.mxu0 0.0
    %762 = vmatpush1.xpose.msra.mxu0 0.0
    %763 = vmatprep.subr.mxu0 0.0
    %764 = vmatpush1.xpose.msra.mxu0 0.0
    %765 = vmatprep.subr.mxu0 0.0
    %766 = vmatpush1.xpose.msra.mxu0 0.0
    %767 = vmatprep.subr.mxu0 0.0
    %768 = vmatpush1.xpose.msra.mxu0 0.0
    %769 = vmatprep.subr.mxu0 0.0
    %770 = vmatpush1.xpose.msra.mxu0 0.0
    %771 = vmatprep.subr.mxu0 0.0
    %772 = vmatpush1.xpose.msra.mxu0 0.0
    %773 = vmatprep.subr.mxu0 0.0
    %774 = vmatpush1.xpose.msra.mxu0 0.0
    %775 = vmatprep.mubr.f32.mxu0 0.0
    %776 = vmatmul.mubr.f32.gmra.mrb[0].mxu0 %v707
    %v777 = vpop.f32.mrb[0].mxu0
    %v778 = vadd.f32 0.0, %v777
    %v779 = vpop.f32.mrb[0].mxu0
    %780 = vdwg.mxu0
    %v781 = vsel %vm160, %v232, -inf
    %782 = vmax.xlane.f32.xlu0 %v781
    %v783 = vpop.xlane.xlu0 %782
    %v784 = vsel %vm160, %v310, -inf
    %785 = vmax.xlane.f32.xlu0 %v784
    %v786 = vpop.xlane.xlu0 %785
    %v787 = vsel %vm160, %v388, -inf
    %788 = vmax.xlane.f32.xlu0 %v787
    %v789 = vpop.xlane.xlu0 %788
    %v790 = vsel %vm160, %v466, -inf
    %791 = vmax.xlane.f32.xlu0 %v790
    %v792 = vpop.xlane.xlu0 %791
    %v793 = vsel %vm160, %v544, -inf
    %794 = vmax.xlane.f32.xlu0 %v793
    %v795 = vpop.xlane.xlu0 %794
    %v796 = vsel %vm160, %v622, -inf
    %797 = vmax.xlane.f32.xlu0 %v796
    %v798 = vpop.xlane.xlu0 %797
    %v799 = vsel %vm160, %v700, -inf
    %800 = vmax.xlane.f32.xlu0 %v799
    %v801 = vpop.xlane.xlu0 %800
    %v802 = vsel %vm160, %v778, -inf
    %803 = vmax.xlane.f32.xlu0 %v802
    %v804 = vpop.xlane.xlu0 %803
    %v805 = vsub.f32 %v232, %v783
    %v806 = vsub.f32 %v310, %v786
    %v807 = vsub.f32 %v388, %v789
    %v808 = vsub.f32 %v466, %v792
    %v809 = vsub.f32 %v544, %v795
    %v810 = vsub.f32 %v622, %v798
    %v811 = vsub.f32 %v700, %v801
    %v812 = vsub.f32 %v778, %v804
    %v813 = vmul.f32 %v805, 1.442695
    %v814 = vpow.pop %v813
    %v815 = vmul.f32 %v806, 1.442695
    %v816 = vpow.pop %v815
    %v817 = vmul.f32 %v807, 1.442695
    %v818 = vpow.pop %v817
    %v819 = vmul.f32 %v808, 1.442695
    %v820 = vpow.pop %v819
    %v821 = vmul.f32 %v809, 1.442695
    %v822 = vpow.pop %v821
    %v823 = vmul.f32 %v810, 1.442695
    %v824 = vpow.pop %v823
    %v825 = vmul.f32 %v811, 1.442695
    %v826 = vpow.pop %v825
    %v827 = vmul.f32 %v812, 1.442695
    %v828 = vpow.pop %v827
    %v829 = vsel %vm160, %v814, 0.0
    %830 = vadd.xlane.f32.xlu0 %v829
    %v831 = vpop.xlane.xlu0 %830
    %v832 = vsel %vm160, %v816, 0.0
    %833 = vadd.xlane.f32.xlu0 %v832
    %v834 = vpop.xlane.xlu0 %833
    %v835 = vsel %vm160, %v818, 0.0
    %836 = vadd.xlane.f32.xlu0 %v835
    %v837 = vpop.xlane.xlu0 %836
    %v838 = vsel %vm160, %v820, 0.0
    %839 = vadd.xlane.f32.xlu0 %v838
    %v840 = vpop.xlane.xlu0 %839
    %v841 = vsel %vm160, %v822, 0.0
    %842 = vadd.xlane.f32.xlu0 %v841
    %v843 = vpop.xlane.xlu0 %842
    %v844 = vsel %vm160, %v824, 0.0
    %845 = vadd.xlane.f32.xlu0 %v844
    %v846 = vpop.xlane.xlu0 %845
    %v847 = vsel %vm160, %v826, 0.0
    %848 = vadd.xlane.f32.xlu0 %v847
    %v849 = vpop.xlane.xlu0 %848
    %v850 = vsel %vm160, %v828, 0.0
    %851 = vadd.xlane.f32.xlu0 %v850
    %v852 = vpop.xlane.xlu0 %851
    %v853 = vrcp.pop %v831
    %v854 = vrcp.pop %v834
    %v855 = vrcp.pop %v837
    %v856 = vrcp.pop %v840
    %v857 = vrcp.pop %v843
    %v858 = vrcp.pop %v846
    %v859 = vrcp.pop %v849
    %v860 = vrcp.pop %v852
    %v861 = vmul.f32 %v814, %v853
    %v862 = vmul.f32 %v816, %v854
    %v863 = vmul.f32 %v818, %v855
    %v864 = vmul.f32 %v820, %v856
    %v865 = vmul.f32 %v822, %v857
    %v866 = vmul.f32 %v824, %v858
    %v867 = vmul.f32 %v826, %v859
    %v868 = vmul.f32 %v828, %v860
    %v870 = vsel %vm160, %v861, 0
    %872 = vmatprep.subr.mxu0 0.0
    %873 = vmatpush1.msra.mxu0 %v128
    %874 = vmatprep.subr.mxu0 0.0
    %875 = vmatpush1.msra.mxu0 0.0
    %876 = vmatprep.subr.mxu0 0.0
    %877 = vmatpush1.msra.mxu0 0.0
    %878 = vmatprep.subr.mxu0 0.0
    %879 = vmatpush1.msra.mxu0 0.0
    %880 = vmatprep.subr.mxu0 0.0
    %881 = vmatpush1.msra.mxu0 0.0
    %882 = vmatprep.subr.mxu0 0.0
    %883 = vmatpush1.msra.mxu0 0.0
    %884 = vmatprep.subr.mxu0 0.0
    %885 = vmatpush1.msra.mxu0 0.0
    %886 = vmatprep.subr.mxu0 0.0
    %887 = vmatpush1.msra.mxu0 0.0
    %888 = vmatprep.subr.mxu0 0.0
    %889 = vmatpush1.msra.mxu0 0.0
    %890 = vmatprep.subr.mxu0 0.0
    %891 = vmatpush1.msra.mxu0 0.0
    %892 = vmatprep.subr.mxu0 0.0
    %893 = vmatpush1.msra.mxu0 0.0
    %894 = vmatprep.subr.mxu0 0.0
    %895 = vmatpush1.msra.mxu0 0.0
    %896 = vmatprep.subr.mxu0 0.0
    %897 = vmatpush1.msra.mxu0 0.0
    %898 = vmatprep.subr.mxu0 0.0
    %899 = vmatpush1.msra.mxu0 0.0
    %900 = vmatprep.subr.mxu0 0.0
    %901 = vmatpush1.msra.mxu0 0.0
    %902 = vmatprep.subr.mxu0 0.0
    %903 = vmatpush1.msra.mxu0 0.0
    %904 = vmatprep.subr.mxu0 0.0
    %905 = vmatpush1.msra.mxu0 0.0
    %906 = vmatprep.subr.mxu0 0.0
    %907 = vmatpush1.msra.mxu0 0.0
    %908 = vmatprep.subr.mxu0 0.0
    %909 = vmatpush1.msra.mxu0 0.0
    %910 = vmatprep.subr.mxu0 0.0
    %911 = vmatpush1.msra.mxu0 0.0
    %912 = vmatprep.subr.mxu0 0.0
    %913 = vmatpush1.msra.mxu0 0.0
    %914 = vmatprep.subr.mxu0 0.0
    %915 = vmatpush1.msra.mxu0 0.0
    %916 = vmatprep.subr.mxu0 0.0
    %917 = vmatpush1.msra.mxu0 0.0
    %918 = vmatprep.subr.mxu0 0.0
    %919 = vmatpush1.msra.mxu0 0.0
    %920 = vmatprep.subr.mxu0 0.0
    %921 = vmatpush1.msra.mxu0 0.0
    %922 = vmatprep.subr.mxu0 0.0
    %923 = vmatpush1.msra.mxu0 0.0
    %924 = vmatprep.subr.mxu0 0.0
    %925 = vmatpush1.msra.mxu0 0.0
    %926 = vmatprep.subr.mxu0 0.0
    %927 = vmatpush1.msra.mxu0 0.0
    %928 = vmatprep.subr.mxu0 0.0
    %929 = vmatpush1.msra.mxu0 0.0
    %930 = vmatprep.subr.mxu0 0.0
    %931 = vmatpush1.msra.mxu0 0.0
    %932 = vmatprep.subr.mxu0 0.0
    %933 = vmatpush1.msra.mxu0 0.0
    %934 = vmatprep.subr.mxu0 0.0
    %935 = vmatpush1.msra.mxu0 0.0
    %936 = vmatprep.mubr.f32.mxu0 0.0
    %937 = vmatmul.mubr.f32.gmra.mrb[0].mxu0 %v870
    %v938 = vpop.f32.mrb[0].mxu0
    %v939 = vadd.f32 0.0, %v938
    %v940 = vpop.f32.mrb[0].mxu0
    %941 = vdwg.mxu0
    %v943 = vsel %vm160, %v862, 0
    %945 = vmatprep.subr.mxu0 0.0
    %946 = vmatpush1.msra.mxu0 %v133
    %947 = vmatprep.subr.mxu0 0.0
    %948 = vmatpush1.msra.mxu0 0.0
    %949 = vmatprep.subr.mxu0 0.0
    %950 = vmatpush1.msra.mxu0 0.0
    %951 = vmatprep.subr.mxu0 0.0
    %952 = vmatpush1.msra.mxu0 0.0
    %953 = vmatprep.subr.mxu0 0.0
    %954 = vmatpush1.msra.mxu0 0.0
    %955 = vmatprep.subr.mxu0 0.0
    %956 = vmatpush1.msra.mxu0 0.0
    %957 = vmatprep.subr.mxu0 0.0
    %958 = vmatpush1.msra.mxu0 0.0
    %959 = vmatprep.subr.mxu0 0.0
    %960 = vmatpush1.msra.mxu0 0.0
    %961 = vmatprep.subr.mxu0 0.0
    %962 = vmatpush1.msra.mxu0 0.0
    %963 = vmatprep.subr.mxu0 0.0
    %964 = vmatpush1.msra.mxu0 0.0
    %965 = vmatprep.subr.mxu0 0.0
    %966 = vmatpush1.msra.mxu0 0.0
    %967 = vmatprep.subr.mxu0 0.0
    %968 = vmatpush1.msra.mxu0 0.0
    %969 = vmatprep.subr.mxu0 0.0
    %970 = vmatpush1.msra.mxu0 0.0
    %971 = vmatprep.subr.mxu0 0.0
    %972 = vmatpush1.msra.mxu0 0.0
    %973 = vmatprep.subr.mxu0 0.0
    %974 = vmatpush1.msra.mxu0 0.0
    %975 = vmatprep.subr.mxu0 0.0
    %976 = vmatpush1.msra.mxu0 0.0
    %977 = vmatprep.subr.mxu0 0.0
    %978 = vmatpush1.msra.mxu0 0.0
    %979 = vmatprep.subr.mxu0 0.0
    %980 = vmatpush1.msra.mxu0 0.0
    %981 = vmatprep.subr.mxu0 0.0
    %982 = vmatpush1.msra.mxu0 0.0
    %983 = vmatprep.subr.mxu0 0.0
    %984 = vmatpush1.msra.mxu0 0.0
    %985 = vmatprep.subr.mxu0 0.0
    %986 = vmatpush1.msra.mxu0 0.0
    %987 = vmatprep.subr.mxu0 0.0
    %988 = vmatpush1.msra.mxu0 0.0
    %989 = vmatprep.subr.mxu0 0.0
    %990 = vmatpush1.msra.mxu0 0.0
    %991 = vmatprep.subr.mxu0 0.0
    %992 = vmatpush1.msra.mxu0 0.0
    %993 = vmatprep.subr.mxu0 0.0
    %994 = vmatpush1.msra.mxu0 0.0
    %995 = vmatprep.subr.mxu0 0.0
    %996 = vmatpush1.msra.mxu0 0.0
    %997 = vmatprep.subr.mxu0 0.0
    %998 = vmatpush1.msra.mxu0 0.0
    %999 = vmatprep.subr.mxu0 0.0
    %1000 = vmatpush1.msra.mxu0 0.0
    %1001 = vmatprep.subr.mxu0 0.0
    %1002 = vmatpush1.msra.mxu0 0.0
    %1003 = vmatprep.subr.mxu0 0.0
    %1004 = vmatpush1.msra.mxu0 0.0
    %1005 = vmatprep.subr.mxu0 0.0
    %1006 = vmatpush1.msra.mxu0 0.0
    %1007 = vmatprep.subr.mxu0 0.0
    %1008 = vmatpush1.msra.mxu0 0.0
    %1009 = vmatprep.mubr.f32.mxu0 0.0
    %1010 = vmatmul.mubr.f32.gmra.mrb[0].mxu0 %v943
    %v1011 = vpop.f32.mrb[0].mxu0
    %v1012 = vadd.f32 0.0, %v1011
    %v1013 = vpop.f32.mrb[0].mxu0
    %1014 = vdwg.mxu0
    %v1016 = vsel %vm160, %v863, 0
    %1018 = vmatprep.subr.mxu0 0.0
    %1019 = vmatpush1.msra.mxu0 %v139
    %1020 = vmatprep.subr.mxu0 0.0
    %1021 = vmatpush1.msra.mxu0 0.0
    %1022 = vmatprep.subr.mxu0 0.0
    %1023 = vmatpush1.msra.mxu0 0.0
    %1024 = vmatprep.subr.mxu0 0.0
    %1025 = vmatpush1.msra.mxu0 0.0
    %1026 = vmatprep.subr.mxu0 0.0
    %1027 = vmatpush1.msra.mxu0 0.0
    %1028 = vmatprep.subr.mxu0 0.0
    %1029 = vmatpush1.msra.mxu0 0.0
    %1030 = vmatprep.subr.mxu0 0.0
    %1031 = vmatpush1.msra.mxu0 0.0
    %1032 = vmatprep.subr.mxu0 0.0
    %1033 = vmatpush1.msra.mxu0 0.0
    %1034 = vmatprep.subr.mxu0 0.0
    %1035 = vmatpush1.msra.mxu0 0.0
    %1036 = vmatprep.subr.mxu0 0.0
    %1037 = vmatpush1.msra.mxu0 0.0
    %1038 = vmatprep.subr.mxu0 0.0
    %1039 = vmatpush1.msra.mxu0 0.0
    %1040 = vmatprep.subr.mxu0 0.0
    %1041 = vmatpush1.msra.mxu0 0.0
    %1042 = vmatprep.subr.mxu0 0.0
    %1043 = vmatpush1.msra.mxu0 0.0
    %1044 = vmatprep.subr.mxu0 0.0
    %1045 = vmatpush1.msra.mxu0 0.0
    %1046 = vmatprep.subr.mxu0 0.0
    %1047 = vmatpush1.msra.mxu0 0.0
    %1048 = vmatprep.subr.mxu0 0.0
    %1049 = vmatpush1.msra.mxu0 0.0
    %1050 = vmatprep.subr.mxu0 0.0
    %1051 = vmatpush1.msra.mxu0 0.0
    %1052 = vmatprep.subr.mxu0 0.0
    %1053 = vmatpush1.msra.mxu0 0.0
    %1054 = vmatprep.subr.mxu0 0.0
    %1055 = vmatpush1.msra.mxu0 0.0
    %1056 = vmatprep.subr.mxu0 0.0
    %1057 = vmatpush1.msra.mxu0 0.0
    %1058 = vmatprep.subr.mxu0 0.0
    %1059 = vmatpush1.msra.mxu0 0.0
    %1060 = vmatprep.subr.mxu0 0.0
    %1061 = vmatpush1.msra.mxu0 0.0
    %1062 = vmatprep.subr.mxu0 0.0
    %1063 = vmatpush1.msra.mxu0 0.0
    %1064 = vmatprep.subr.mxu0 0.0
    %1065 = vmatpush1.msra.mxu0 0.0
    %1066 = vmatprep.subr.mxu0 0.0
    %1067 = vmatpush1.msra.mxu0 0.0
    %1068 = vmatprep.subr.mxu0 0.0
    %1069 = vmatpush1.msra.mxu0 0.0
    %1070 = vmatprep.subr.mxu0 0.0
    %1071 = vmatpush1.msra.mxu0 0.0
    %1072 = vmatprep.subr.mxu0 0.0
    %1073 = vmatpush1.msra.mxu0 0.0
    %1074 = vmatprep.subr.mxu0 0.0
    %1075 = vmatpush1.msra.mxu0 0.0
    %1076 = vmatprep.subr.mxu0 0.0
    %1077 = vmatpush1.msra.mxu0 0.0
    %1078 = vmatprep.subr.mxu0 0.0
    %1079 = vmatpush1.msra.mxu0 0.0
    %1080 = vmatprep.subr.mxu0 0.0
    %1081 = vmatpush1.msra.mxu0 0.0
    %1082 = vmatprep.mubr.f32.mxu0 0.0
    %1083 = vmatmul.mubr.f32.gmra.mrb[0].mxu0 %v1016
    %v1084 = vpop.f32.mrb[0].mxu0
    %v1085 = vadd.f32 0.0, %v1084
    %v1086 = vpop.f32.mrb[0].mxu0
    %1087 = vdwg.mxu0
    %v1089 = vsel %vm160, %v864, 0
    %1091 = vmatprep.subr.mxu0 0.0
    %1092 = vmatpush1.msra.mxu0 %v141
    %1093 = vmatprep.subr.mxu0 0.0
    %1094 = vmatpush1.msra.mxu0 0.0
    %1095 = vmatprep.subr.mxu0 0.0
    %1096 = vmatpush1.msra.mxu0 0.0
    %1097 = vmatprep.subr.mxu0 0.0
    %1098 = vmatpush1.msra.mxu0 0.0
    %1099 = vmatprep.subr.mxu0 0.0
    %1100 = vmatpush1.msra.mxu0 0.0
    %1101 = vmatprep.subr.mxu0 0.0
    %1102 = vmatpush1.msra.mxu0 0.0
    %1103 = vmatprep.subr.mxu0 0.0
    %1104 = vmatpush1.msra.mxu0 0.0
    %1105 = vmatprep.subr.mxu0 0.0
    %1106 = vmatpush1.msra.mxu0 0.0
    %1107 = vmatprep.subr.mxu0 0.0
    %1108 = vmatpush1.msra.mxu0 0.0
    %1109 = vmatprep.subr.mxu0 0.0
    %1110 = vmatpush1.msra.mxu0 0.0
    %1111 = vmatprep.subr.mxu0 0.0
    %1112 = vmatpush1.msra.mxu0 0.0
    %1113 = vmatprep.subr.mxu0 0.0
    %1114 = vmatpush1.msra.mxu0 0.0
    %1115 = vmatprep.subr.mxu0 0.0
    %1116 = vmatpush1.msra.mxu0 0.0
    %1117 = vmatprep.subr.mxu0 0.0
    %1118 = vmatpush1.msra.mxu0 0.0
    %1119 = vmatprep.subr.mxu0 0.0
    %1120 = vmatpush1.msra.mxu0 0.0
    %1121 = vmatprep.subr.mxu0 0.0
    %1122 = vmatpush1.msra.mxu0 0.0
    %1123 = vmatprep.subr.mxu0 0.0
    %1124 = vmatpush1.msra.mxu0 0.0
    %1125 = vmatprep.subr.mxu0 0.0
    %1126 = vmatpush1.msra.mxu0 0.0
    %1127 = vmatprep.subr.mxu0 0.0
    %1128 = vmatpush1.msra.mxu0 0.0
    %1129 = vmatprep.subr.mxu0 0.0
    %1130 = vmatpush1.msra.mxu0 0.0
    %1131 = vmatprep.subr.mxu0 0.0
    %1132 = vmatpush1.msra.mxu0 0.0
    %1133 = vmatprep.subr.mxu0 0.0
    %1134 = vmatpush1.msra.mxu0 0.0
    %1135 = vmatprep.subr.mxu0 0.0
    %1136 = vmatpush1.msra.mxu0 0.0
    %1137 = vmatprep.subr.mxu0 0.0
    %1138 = vmatpush1.msra.mxu0 0.0
    %1139 = vmatprep.subr.mxu0 0.0
    %1140 = vmatpush1.msra.mxu0 0.0
    %1141 = vmatprep.subr.mxu0 0.0
    %1142 = vmatpush1.msra.mxu0 0.0
    %1143 = vmatprep.subr.mxu0 0.0
    %1144 = vmatpush1.msra.mxu0 0.0
    %1145 = vmatprep.subr.mxu0 0.0
    %1146 = vmatpush1.msra.mxu0 0.0
    %1147 = vmatprep.subr.mxu0 0.0
    %1148 = vmatpush1.msra.mxu0 0.0
    %1149 = vmatprep.subr.mxu0 0.0
    %1150 = vmatpush1.msra.mxu0 0.0
    %1151 = vmatprep.subr.mxu0 0.0
    %1152 = vmatpush1.msra.mxu0 0.0
    %1153 = vmatprep.subr.mxu0 0.0
    %1154 = vmatpush1.msra.mxu0 0.0
    %1155 = vmatprep.mubr.f32.mxu0 0.0
    %1156 = vmatmul.mubr.f32.gmra.mrb[0].mxu0 %v1089
    %v1157 = vpop.f32.mrb[0].mxu0
    %v1158 = vadd.f32 0.0, %v1157
    %v1159 = vpop.f32.mrb[0].mxu0
    %1160 = vdwg.mxu0
    %v1162 = vsel %vm160, %v865, 0
    %1164 = vmatprep.subr.mxu0 0.0
    %1165 = vmatpush1.msra.mxu0 %v143
    %1166 = vmatprep.subr.mxu0 0.0
    %1167 = vmatpush1.msra.mxu0 0.0
    %1168 = vmatprep.subr.mxu0 0.0
    %1169 = vmatpush1.msra.mxu0 0.0
    %1170 = vmatprep.subr.mxu0 0.0
    %1171 = vmatpush1.msra.mxu0 0.0
    %1172 = vmatprep.subr.mxu0 0.0
    %1173 = vmatpush1.msra.mxu0 0.0
    %1174 = vmatprep.subr.mxu0 0.0
    %1175 = vmatpush1.msra.mxu0 0.0
    %1176 = vmatprep.subr.mxu0 0.0
    %1177 = vmatpush1.msra.mxu0 0.0
    %1178 = vmatprep.subr.mxu0 0.0
    %1179 = vmatpush1.msra.mxu0 0.0
    %1180 = vmatprep.subr.mxu0 0.0
    %1181 = vmatpush1.msra.mxu0 0.0
    %1182 = vmatprep.subr.mxu0 0.0
    %1183 = vmatpush1.msra.mxu0 0.0
    %1184 = vmatprep.subr.mxu0 0.0
    %1185 = vmatpush1.msra.mxu0 0.0
    %1186 = vmatprep.subr.mxu0 0.0
    %1187 = vmatpush1.msra.mxu0 0.0
    %1188 = vmatprep.subr.mxu0 0.0
    %1189 = vmatpush1.msra.mxu0 0.0
    %1190 = vmatprep.subr.mxu0 0.0
    %1191 = vmatpush1.msra.mxu0 0.0
    %1192 = vmatprep.subr.mxu0 0.0
    %1193 = vmatpush1.msra.mxu0 0.0
    %1194 = vmatprep.subr.mxu0 0.0
    %1195 = vmatpush1.msra.mxu0 0.0
    %1196 = vmatprep.subr.mxu0 0.0
    %1197 = vmatpush1.msra.mxu0 0.0
    %1198 = vmatprep.subr.mxu0 0.0
    %1199 = vmatpush1.msra.mxu0 0.0
    %1200 = vmatprep.subr.mxu0 0.0
    %1201 = vmatpush1.msra.mxu0 0.0
    %1202 = vmatprep.subr.mxu0 0.0
    %1203 = vmatpush1.msra.mxu0 0.0
    %1204 = vmatprep.subr.mxu0 0.0
    %1205 = vmatpush1.msra.mxu0 0.0
    %1206 = vmatprep.subr.mxu0 0.0
    %1207 = vmatpush1.msra.mxu0 0.0
    %1208 = vmatprep.subr.mxu0 0.0
    %1209 = vmatpush1.msra.mxu0 0.0
    %1210 = vmatprep.subr.mxu0 0.0
    %1211 = vmatpush1.msra.mxu0 0.0
    %1212 = vmatprep.subr.mxu0 0.0
    %1213 = vmatpush1.msra.mxu0 0.0
    %1214 = vmatprep.subr.mxu0 0.0
    %1215 = vmatpush1.msra.mxu0 0.0
    %1216 = vmatprep.subr.mxu0 0.0
    %1217 = vmatpush1.msra.mxu0 0.0
    %1218 = vmatprep.subr.mxu0 0.0
    %1219 = vmatpush1.msra.mxu0 0.0
    %1220 = vmatprep.subr.mxu0 0.0
    %1221 = vmatpush1.msra.mxu0 0.0
    %1222 = vmatprep.subr.mxu0 0.0
    %1223 = vmatpush1.msra.mxu0 0.0
    %1224 = vmatprep.subr.mxu0 0.0
    %1225 = vmatpush1.msra.mxu0 0.0
    %1226 = vmatprep.subr.mxu0 0.0
    %1227 = vmatpush1.msra.mxu0 0.0
    %1228 = vmatprep.mubr.f32.mxu0 0.0
    %1229 = vmatmul.mubr.f32.gmra.mrb[0].mxu0 %v1162
    %v1230 = vpop.f32.mrb[0].mxu0
    %v1231 = vadd.f32 0.0, %v1230
    %v1232 = vpop.f32.mrb[0].mxu0
    %1233 = vdwg.mxu0
    %v1235 = vsel %vm160, %v866, 0
    %1237 = vmatprep.subr.mxu0 0.0
    %1238 = vmatpush1.msra.mxu0 %v145
    %1239 = vmatprep.subr.mxu0 0.0
    %1240 = vmatpush1.msra.mxu0 0.0
    %1241 = vmatprep.subr.mxu0 0.0
    %1242 = vmatpush1.msra.mxu0 0.0
    %1243 = vmatprep.subr.mxu0 0.0
    %1244 = vmatpush1.msra.mxu0 0.0
    %1245 = vmatprep.subr.mxu0 0.0
    %1246 = vmatpush1.msra.mxu0 0.0
    %1247 = vmatprep.subr.mxu0 0.0
    %1248 = vmatpush1.msra.mxu0 0.0
    %1249 = vmatprep.subr.mxu0 0.0
    %1250 = vmatpush1.msra.mxu0 0.0
    %1251 = vmatprep.subr.mxu0 0.0
    %1252 = vmatpush1.msra.mxu0 0.0
    %1253 = vmatprep.subr.mxu0 0.0
    %1254 = vmatpush1.msra.mxu0 0.0
    %1255 = vmatprep.subr.mxu0 0.0
    %1256 = vmatpush1.msra.mxu0 0.0
    %1257 = vmatprep.subr.mxu0 0.0
    %1258 = vmatpush1.msra.mxu0 0.0
    %1259 = vmatprep.subr.mxu0 0.0
    %1260 = vmatpush1.msra.mxu0 0.0
    %1261 = vmatprep.subr.mxu0 0.0
    %1262 = vmatpush1.msra.mxu0 0.0
    %1263 = vmatprep.subr.mxu0 0.0
    %1264 = vmatpush1.msra.mxu0 0.0
    %1265 = vmatprep.subr.mxu0 0.0
    %1266 = vmatpush1.msra.mxu0 0.0
    %1267 = vmatprep.subr.mxu0 0.0
    %1268 = vmatpush1.msra.mxu0 0.0
    %1269 = vmatprep.subr.mxu0 0.0
    %1270 = vmatpush1.msra.mxu0 0.0
    %1271 = vmatprep.subr.mxu0 0.0
    %1272 = vmatpush1.msra.mxu0 0.0
    %1273 = vmatprep.subr.mxu0 0.0
    %1274 = vmatpush1.msra.mxu0 0.0
    %1275 = vmatprep.subr.mxu0 0.0
    %1276 = vmatpush1.msra.mxu0 0.0
    %1277 = vmatprep.subr.mxu0 0.0
    %1278 = vmatpush1.msra.mxu0 0.0
    %1279 = vmatprep.subr.mxu0 0.0
    %1280 = vmatpush1.msra.mxu0 0.0
    %1281 = vmatprep.subr.mxu0 0.0
    %1282 = vmatpush1.msra.mxu0 0.0
    %1283 = vmatprep.subr.mxu0 0.0
    %1284 = vmatpush1.msra.mxu0 0.0
    %1285 = vmatprep.subr.mxu0 0.0
    %1286 = vmatpush1.msra.mxu0 0.0
    %1287 = vmatprep.subr.mxu0 0.0
    %1288 = vmatpush1.msra.mxu0 0.0
    %1289 = vmatprep.subr.mxu0 0.0
    %1290 = vmatpush1.msra.mxu0 0.0
    %1291 = vmatprep.subr.mxu0 0.0
    %1292 = vmatpush1.msra.mxu0 0.0
    %1293 = vmatprep.subr.mxu0 0.0
    %1294 = vmatpush1.msra.mxu0 0.0
    %1295 = vmatprep.subr.mxu0 0.0
    %1296 = vmatpush1.msra.mxu0 0.0
    %1297 = vmatprep.subr.mxu0 0.0
    %1298 = vmatpush1.msra.mxu0 0.0
    %1299 = vmatprep.subr.mxu0 0.0
    %1300 = vmatpush1.msra.mxu0 0.0
    %1301 = vmatprep.mubr.f32.mxu0 0.0
    %1302 = vmatmul.mubr.f32.gmra.mrb[0].mxu0 %v1235
    %v1303 = vpop.f32.mrb[0].mxu0
    %v1304 = vadd.f32 0.0, %v1303
    %v1305 = vpop.f32.mrb[0].mxu0
    %1306 = vdwg.mxu0
    %v1308 = vsel %vm160, %v867, 0
    %1310 = vmatprep.subr.mxu0 0.0
    %1311 = vmatpush1.msra.mxu0 %v147
    %1312 = vmatprep.subr.mxu0 0.0
    %1313 = vmatpush1.msra.mxu0 0.0
    %1314 = vmatprep.subr.mxu0 0.0
    %1315 = vmatpush1.msra.mxu0 0.0
    %1316 = vmatprep.subr.mxu0 0.0
    %1317 = vmatpush1.msra.mxu0 0.0
    %1318 = vmatprep.subr.mxu0 0.0
    %1319 = vmatpush1.msra.mxu0 0.0
    %1320 = vmatprep.subr.mxu0 0.0
    %1321 = vmatpush1.msra.mxu0 0.0
    %1322 = vmatprep.subr.mxu0 0.0
    %1323 = vmatpush1.msra.mxu0 0.0
    %1324 = vmatprep.subr.mxu0 0.0
    %1325 = vmatpush1.msra.mxu0 0.0
    %1326 = vmatprep.subr.mxu0 0.0
    %1327 = vmatpush1.msra.mxu0 0.0
    %1328 = vmatprep.subr.mxu0 0.0
    %1329 = vmatpush1.msra.mxu0 0.0
    %1330 = vmatprep.subr.mxu0 0.0
    %1331 = vmatpush1.msra.mxu0 0.0
    %1332 = vmatprep.subr.mxu0 0.0
    %1333 = vmatpush1.msra.mxu0 0.0
    %1334 = vmatprep.subr.mxu0 0.0
    %1335 = vmatpush1.msra.mxu0 0.0
    %1336 = vmatprep.subr.mxu0 0.0
    %1337 = vmatpush1.msra.mxu0 0.0
    %1338 = vmatprep.subr.mxu0 0.0
    %1339 = vmatpush1.msra.mxu0 0.0
    %1340 = vmatprep.subr.mxu0 0.0
    %1341 = vmatpush1.msra.mxu0 0.0
    %1342 = vmatprep.subr.mxu0 0.0
    %1343 = vmatpush1.msra.mxu0 0.0
    %1344 = vmatprep.subr.mxu0 0.0
    %1345 = vmatpush1.msra.mxu0 0.0
    %1346 = vmatprep.subr.mxu0 0.0
    %1347 = vmatpush1.msra.mxu0 0.0
    %1348 = vmatprep.subr.mxu0 0.0
    %1349 = vmatpush1.msra.mxu0 0.0
    %1350 = vmatprep.subr.mxu0 0.0
    %1351 = vmatpush1.msra.mxu0 0.0
    %1352 = vmatprep.subr.mxu0 0.0
    %1353 = vmatpush1.msra.mxu0 0.0
    %1354 = vmatprep.subr.mxu0 0.0
    %1355 = vmatpush1.msra.mxu0 0.0
    %1356 = vmatprep.subr.mxu0 0.0
    %1357 = vmatpush1.msra.mxu0 0.0
    %1358 = vmatprep.subr.mxu0 0.0
    %1359 = vmatpush1.msra.mxu0 0.0
    %1360 = vmatprep.subr.mxu0 0.0
    %1361 = vmatpush1.msra.mxu0 0.0
    %1362 = vmatprep.subr.mxu0 0.0
    %1363 = vmatpush1.msra.mxu0 0.0
    %1364 = vmatprep.subr.mxu0 0.0
    %1365 = vmatpush1.msra.mxu0 0.0
    %1366 = vmatprep.subr.mxu0 0.0
    %1367 = vmatpush1.msra.mxu0 0.0
    %1368 = vmatprep.subr.mxu0 0.0
    %1369 = vmatpush1.msra.mxu0 0.0
    %1370 = vmatprep.subr.mxu0 0.0
    %1371 = vmatpush1.msra.mxu0 0.0
    %1372 = vmatprep.subr.mxu0 0.0
    %1373 = vmatpush1.msra.mxu0 0.0
    %1374 = vmatprep.mubr.f32.mxu0 0.0
    %1375 = vmatmul.mubr.f32.gmra.mrb[0].mxu0 %v1308
    %v1376 = vpop.f32.mrb[0].mxu0
    %v1377 = vadd.f32 0.0, %v1376
    %v1378 = vpop.f32.mrb[0].mxu0
    %1379 = vdwg.mxu0
    %v1381 = vsel %vm160, %v868, 0
    %1383 = vmatprep.subr.mxu0 0.0
    %1384 = vmatpush1.msra.mxu0 %v149
    %1385 = vmatprep.subr.mxu0 0.0
    %1386 = vmatpush1.msra.mxu0 0.0
    %1387 = vmatprep.subr.mxu0 0.0
    %1388 = vmatpush1.msra.mxu0 0.0
    %1389 = vmatprep.subr.mxu0 0.0
    %1390 = vmatpush1.msra.mxu0 0.0
    %1391 = vmatprep.subr.mxu0 0.0
    %1392 = vmatpush1.msra.mxu0 0.0
    %1393 = vmatprep.subr.mxu0 0.0
    %1394 = vmatpush1.msra.mxu0 0.0
    %1395 = vmatprep.subr.mxu0 0.0
    %1396 = vmatpush1.msra.mxu0 0.0
    %1397 = vmatprep.subr.mxu0 0.0
    %1398 = vmatpush1.msra.mxu0 0.0
    %1399 = vmatprep.subr.mxu0 0.0
    %1400 = vmatpush1.msra.mxu0 0.0
    %1401 = vmatprep.subr.mxu0 0.0
    %1402 = vmatpush1.msra.mxu0 0.0
    %1403 = vmatprep.subr.mxu0 0.0
    %1404 = vmatpush1.msra.mxu0 0.0
    %1405 = vmatprep.subr.mxu0 0.0
    %1406 = vmatpush1.msra.mxu0 0.0
    %1407 = vmatprep.subr.mxu0 0.0
    %1408 = vmatpush1.msra.mxu0 0.0
    %1409 = vmatprep.subr.mxu0 0.0
    %1410 = vmatpush1.msra.mxu0 0.0
    %1411 = vmatprep.subr.mxu0 0.0
    %1412 = vmatpush1.msra.mxu0 0.0
    %1413 = vmatprep.subr.mxu0 0.0
    %1414 = vmatpush1.msra.mxu0 0.0
    %1415 = vmatprep.subr.mxu0 0.0
    %1416 = vmatpush1.msra.mxu0 0.0
    %1417 = vmatprep.subr.mxu0 0.0
    %1418 = vmatpush1.msra.mxu0 0.0
    %1419 = vmatprep.subr.mxu0 0.0
    %1420 = vmatpush1.msra.mxu0 0.0
    %1421 = vmatprep.subr.mxu0 0.0
    %1422 = vmatpush1.msra.mxu0 0.0
    %1423 = vmatprep.subr.mxu0 0.0
    %1424 = vmatpush1.msra.mxu0 0.0
    %1425 = vmatprep.subr.mxu0 0.0
    %1426 = vmatpush1.msra.mxu0 0.0
    %1427 = vmatprep.subr.mxu0 0.0
    %1428 = vmatpush1.msra.mxu0 0.0
    %1429 = vmatprep.subr.mxu0 0.0
    %1430 = vmatpush1.msra.mxu0 0.0
    %1431 = vmatprep.subr.mxu0 0.0
    %1432 = vmatpush1.msra.mxu0 0.0
    %1433 = vmatprep.subr.mxu0 0.0
    %1434 = vmatpush1.msra.mxu0 0.0
    %1435 = vmatprep.subr.mxu0 0.0
    %1436 = vmatpush1.msra.mxu0 0.0
    %1437 = vmatprep.subr.mxu0 0.0
    %1438 = vmatpush1.msra.mxu0 0.0
    %1439 = vmatprep.subr.mxu0 0.0
    %1440 = vmatpush1.msra.mxu0 0.0
    %1441 = vmatprep.subr.mxu0 0.0
    %1442 = vmatpush1.msra.mxu0 0.0
    %1443 = vmatprep.subr.mxu0 0.0
    %1444 = vmatpush1.msra.mxu0 0.0
    %1445 = vmatprep.subr.mxu0 0.0
    %1446 = vmatpush1.msra.mxu0 0.0
    %1447 = vmatprep.mubr.f32.mxu0 0.0
    %1448 = vmatmul.mubr.f32.gmra.mrb[0].mxu0 %v1381
    %v1449 = vpop.f32.mrb[0].mxu0
    %v1450 = vadd.f32 0.0, %v1449
    %v1451 = vpop.f32.mrb[0].mxu0
    %1452 = vdwg.mxu0
    %1455 = vrot.lane.b32.xlu0 %v1085, 8
    %v1456 = vpop.permute.xlu0 %1455
    %1457 = vrot.lane.b32.xlu0 %v1158, 8
    %v1458 = vpop.permute.xlu0 %1457
    %1463 = vrot.lane.b32.xlu0 %v1231, 16
    %v1464 = vpop.permute.xlu0 %1463
    %1465 = vrot.lane.b32.xlu0 %v1304, 16
    %v1466 = vpop.permute.xlu0 %1465
    %1471 = vrot.lane.b32.xlu0 %v1377, 24
    %v1472 = vpop.permute.xlu0 %1471
    %1473 = vrot.lane.b32.xlu0 %v1450, 24
    %v1474 = vpop.permute.xlu0 %1473
    %v1477 = vsel %vm160, %v939, %v1456
    %v1478 = vsel %vm160, %v1012, %v1458
    %vm1479 = vcmask 130048
    %v1480 = vsel %vm1479, %v1477, %v1464
    %v1481 = vsel %vm1479, %v1478, %v1466
    %vm1482 = vcmask 195584
    %v1483 = vsel %vm1482, %v1480, %v1472
    %v1484 = vsel %vm1482, %v1481, %v1474
    %v1485 = vlaneseq
    %v1486 = vshrl.u32 %v1485, 7
    %v1487 = vsub.s32 1, %v1486
    %v1488 = vrot.slane %v41, %v1487
    %vm1489 = vcmask 261120
    %v1491 = vsel %vm1489, %v1483, 0
    %v1494 = vsel %vm1489, %v1484, 0
    %1496 = vmatprep.subr.mxu0 0.0
    %1497 = vmatpush1.msra.mxu0 %v37
    %1498 = vmatprep.subr.mxu0 0.0
    %1499 = vmatpush1.msra.mxu0 %v38
    %1500 = vmatprep.subr.mxu0 0.0
    %1501 = vmatpush1.msra.mxu0 %v39
    %1502 = vmatprep.subr.mxu0 0.0
    %1503 = vmatpush1.msra.mxu0 %v40
    %1504 = vmatprep.subr.mxu0 0.0
    %1505 = vmatpush1.msra.mxu0 0.0
    %1506 = vmatprep.subr.mxu0 0.0
    %1507 = vmatpush1.msra.mxu0 0.0
    %1508 = vmatprep.subr.mxu0 0.0
    %1509 = vmatpush1.msra.mxu0 0.0
    %1510 = vmatprep.subr.mxu0 0.0
    %1511 = vmatpush1.msra.mxu0 0.0
    %1512 = vmatprep.subr.mxu0 0.0
    %1513 = vmatpush1.msra.mxu0 0.0
    %1514 = vmatprep.subr.mxu0 0.0
    %1515 = vmatpush1.msra.mxu0 0.0
    %1516 = vmatprep.subr.mxu0 0.0
    %1517 = vmatpush1.msra.mxu0 0.0
    %1518 = vmatprep.subr.mxu0 0.0
    %1519 = vmatpush1.msra.mxu0 0.0
    %1520 = vmatprep.subr.mxu0 0.0
    %1521 = vmatpush1.msra.mxu0 0.0
    %1522 = vmatprep.subr.mxu0 0.0
    %1523 = vmatpush1.msra.mxu0 0.0
    %1524 = vmatprep.subr.mxu0 0.0
    %1525 = vmatpush1.msra.mxu0 0.0
    %1526 = vmatprep.subr.mxu0 0.0
    %1527 = vmatpush1.msra.mxu0 0.0
    %1528 = vmatprep.subr.mxu0 0.0
    %1529 = vmatpush1.msra.mxu0 0.0
    %1530 = vmatprep.subr.mxu0 0.0
    %1531 = vmatpush1.msra.mxu0 0.0
    %1532 = vmatprep.subr.mxu0 0.0
    %1533 = vmatpush1.msra.mxu0 0.0
    %1534 = vmatprep.subr.mxu0 0.0
    %1535 = vmatpush1.msra.mxu0 0.0
    %1536 = vmatprep.subr.mxu0 0.0
    %1537 = vmatpush1.msra.mxu0 0.0
    %1538 = vmatprep.subr.mxu0 0.0
    %1539 = vmatpush1.msra.mxu0 0.0
    %1540 = vmatprep.subr.mxu0 0.0
    %1541 = vmatpush1.msra.mxu0 0.0
    %1542 = vmatprep.subr.mxu0 0.0
    %1543 = vmatpush1.msra.mxu0 0.0
    %1544 = vmatprep.subr.mxu0 0.0
    %1545 = vmatpush1.msra.mxu0 0.0
    %1546 = vmatprep.subr.mxu0 0.0
    %1547 = vmatpush1.msra.mxu0 0.0
    %1548 = vmatprep.subr.mxu0 0.0
    %1549 = vmatpush1.msra.mxu0 0.0
    %1550 = vmatprep.subr.mxu0 0.0
    %1551 = vmatpush1.msra.mxu0 0.0
    %1552 = vmatprep.subr.mxu0 0.0
    %1553 = vmatpush1.msra.mxu0 0.0
    %1554 = vmatprep.subr.mxu0 0.0
    %1555 = vmatpush1.msra.mxu0 0.0
    %1556 = vmatprep.subr.mxu0 0.0
    %1557 = vmatpush1.msra.mxu0 0.0
    %1558 = vmatprep.subr.mxu0 0.0
    %1559 = vmatpush1.msra.mxu0 0.0
    %1560 = vmatprep.mubr.f32.mxu0 0.0
    %1561 = vmatmul.mubr.f32.gmra.mrb[0].mxu0 %v1491
    %v1562 = vpop.f32.mrb[0].mxu0
    %v1563 = vadd.f32 %v1488, %v1562
    %v1564 = vpop.f32.mrb[0].mxu0
    %1565 = vmatprep.mubr.f32.mxu0 0.0
    %1566 = vmatmul.mubr.f32.gmra.mrb[0].mxu0 %v1494
    %v1567 = vpop.f32.mrb[0].mxu0
    %v1568 = vadd.f32 %v1488, %v1567
    %v1569 = vpop.f32.mrb[0].mxu0
    %1570 = vdwg.mxu0
    %1571 = vrot.lane.b32.xlu0 %v15, 64
    %v1572 = vpop.permute.xlu0 %1571
    %1573 = vrot.lane.b32.xlu0 %v16, 64
    %v1574 = vpop.permute.xlu0 %1573
    %v1577 = vadd.f32 %v1563, %v1572
    %v1578 = vadd.f32 %v1568, %v1574
    %v1579 = vsel %vm1489, %v1577, 0.0
    %1580 = vadd.xlane.f32.xlu0 %v1579
    %v1581 = vpop.xlane.xlu0 %1580
    %v1582 = vsel %vm1489, %v1578, 0.0
    %1583 = vadd.xlane.f32.xlu0 %v1582
    %v1584 = vpop.xlane.xlu0 %1583
    %v1585 = vrcp.pop 32.0
    %v1586 = vmul.f32 %v1581, %v1585
    %v1587 = vmul.f32 %v1584, %v1585
    %v1588 = vsub.f32 %v1577, %v1586
    %v1589 = vsub.f32 %v1578, %v1587
    %v1590 = vmul.f32 %v1588, %v1588
    %v1591 = vmul.f32 %v1589, %v1589
    %v1592 = vsel %vm1489, %v1590, 0.0
    %1593 = vadd.xlane.f32.xlu0 %v1592
    %v1594 = vpop.xlane.xlu0 %1593
    %v1595 = vsel %vm1489, %v1591, 0.0
    %1596 = vadd.xlane.f32.xlu0 %v1595
    %v1597 = vpop.xlane.xlu0 %1596
    %v1598 = vmul.f32 %v1594, %v1585
    %v1599 = vmul.f32 %v1597, %v1585
    %v1600 = vadd.f32 %v1598, 1e-05
    %v1601 = vadd.f32 %v1599, 1e-05
    %v1602 = vrsqrt.pop %v1600
    %v1603 = vrsqrt.pop %v1601
    %v1604 = vmul.f32 %v1588, %v1602
    %v1605 = vmul.f32 %v1589, %v1603
    %v1606 = vlaneseq
    %v1607 = vshrl.u32 %v1606, 7
    %v1608 = vsub.s32 2, %v1607
    %v1609 = vrot.slane %v41, %v1608
    %v1610 = vmul.f32 %v1604, %v1609
    %v1611 = vmul.f32 %v1605, %v1609
    %v1612 = vlaneseq
    %v1613 = vshrl.u32 %v1612, 7
    %v1614 = vsub.s32 3, %v1613
    %v1615 = vrot.slane %v41, %v1614
    %v1616 = vadd.f32 %v1610, %v1615
    %v1617 = vadd.f32 %v1611, %v1615
    %v1618 = vlaneseq
    %v1619 = vshrl.u32 %v1618, 7
    %v1620 = vsub.s32 0, %v1619
    %v1621 = vrot.slane %v41, %v1620
    %v1623 = vsel %vm1489, %v1616, 0
    %v1626 = vsel %vm1489, %v1617, 0
    %1628 = vmatprep.subr.mxu0 0.0
    %1629 = vmatpush1.msra.mxu0 %v17
    %1630 = vmatprep.subr.mxu0 0.0
    %1631 = vmatpush1.msra.mxu0 %v18
    %1632 = vmatprep.subr.mxu0 0.0
    %1633 = vmatpush1.msra.mxu0 %v19
    %1634 = vmatprep.subr.mxu0 0.0
    %1635 = vmatpush1.msra.mxu0 %v20
    %1636 = vmatprep.subr.mxu0 0.0
    %1637 = vmatpush1.msra.mxu0 0.0
    %1638 = vmatprep.subr.mxu0 0.0
    %1639 = vmatpush1.msra.mxu0 0.0
    %1640 = vmatprep.subr.mxu0 0.0
    %1641 = vmatpush1.msra.mxu0 0.0
    %1642 = vmatprep.subr.mxu0 0.0
    %1643 = vmatpush1.msra.mxu0 0.0
    %1644 = vmatprep.subr.mxu0 0.0
    %1645 = vmatpush1.msra.mxu0 0.0
    %1646 = vmatprep.subr.mxu0 0.0
    %1647 = vmatpush1.msra.mxu0 0.0
    %1648 = vmatprep.subr.mxu0 0.0
    %1649 = vmatpush1.msra.mxu0 0.0
    %1650 = vmatprep.subr.mxu0 0.0
    %1651 = vmatpush1.msra.mxu0 0.0
    %1652 = vmatprep.subr.mxu0 0.0
    %1653 = vmatpush1.msra.mxu0 0.0
    %1654 = vmatprep.subr.mxu0 0.0
    %1655 = vmatpush1.msra.mxu0 0.0
    %1656 = vmatprep.subr.mxu0 0.0
    %1657 = vmatpush1.msra.mxu0 0.0
    %1658 = vmatprep.subr.mxu0 0.0
    %1659 = vmatpush1.msra.mxu0 0.0
    %1660 = vmatprep.subr.mxu0 0.0
    %1661 = vmatpush1.msra.mxu0 0.0
    %1662 = vmatprep.subr.mxu0 0.0
    %1663 = vmatpush1.msra.mxu0 0.0
    %1664 = vmatprep.subr.mxu0 0.0
    %1665 = vmatpush1.msra.mxu0 0.0
    %1666 = vmatprep.subr.mxu0 0.0
    %1667 = vmatpush1.msra.mxu0 0.0
    %1668 = vmatprep.subr.mxu0 0.0
    %1669 = vmatpush1.msra.mxu0 0.0
    %1670 = vmatprep.subr.mxu0 0.0
    %1671 = vmatpush1.msra.mxu0 0.0
    %1672 = vmatprep.subr.mxu0 0.0
    %1673 = vmatpush1.msra.mxu0 0.0
    %1674 = vmatprep.subr.mxu0 0.0
    %1675 = vmatpush1.msra.mxu0 0.0
    %1676 = vmatprep.subr.mxu0 0.0
    %1677 = vmatpush1.msra.mxu0 0.0
    %1678 = vmatprep.subr.mxu0 0.0
    %1679 = vmatpush1.msra.mxu0 0.0
    %1680 = vmatprep.subr.mxu0 0.0
    %1681 = vmatpush1.msra.mxu0 0.0
    %1682 = vmatprep.subr.mxu0 0.0
    %1683 = vmatpush1.msra.mxu0 0.0
    %1684 = vmatprep.subr.mxu0 0.0
    %1685 = vmatpush1.msra.mxu0 0.0
    %1686 = vmatprep.subr.mxu0 0.0
    %1687 = vmatpush1.msra.mxu0 0.0
    %1688 = vmatprep.subr.mxu0 0.0
    %1689 = vmatpush1.msra.mxu0 0.0
    %1690 = vmatprep.subr.mxu0 0.0
    %1691 = vmatpush1.msra.mxu0 0.0
    %1692 = vmatprep.mubr.f32.mxu0 0.0
    %1693 = vmatmul.mubr.f32.gmra.mrb[0].mxu0 %v1623
    %v1694 = vpop.f32.mrb[0].mxu0
    %v1695 = vadd.f32 %v1621, %v1694
    %v1696 = vpop.f32.mrb[0].mxu0
    %1697 = vmatprep.mubr.f32.mxu0 0.0
    %1698 = vmatmul.mubr.f32.gmra.mrb[0].mxu0 %v1626
    %v1699 = vpop.f32.mrb[0].mxu0
    %v1700 = vadd.f32 %v1621, %v1699
    %v1701 = vpop.f32.mrb[0].mxu0
    %1702 = vdwg.mxu0
    %v1703 = vmax.f32 %v1695, 0.0
    %v1704 = vmax.f32 %v1700, 0.0
    %v1705 = vlaneseq
    %v1706 = vshrl.u32 %v1705, 7
    %v1707 = vsub.s32 4, %v1706
    %v1708 = vrot.slane %v41, %v1707
    %1709 = vmatprep.subr.mxu0 0.0
    %1710 = vmatpush1.msra.mxu0 %v21
    %1711 = vmatprep.subr.mxu0 0.0
    %1712 = vmatpush1.msra.mxu0 %v22
    %1713 = vmatprep.subr.mxu0 0.0
    %1714 = vmatpush1.msra.mxu0 %v23
    %1715 = vmatprep.subr.mxu0 0.0
    %1716 = vmatpush1.msra.mxu0 %v24
    %1717 = vmatprep.subr.mxu0 0.0
    %1718 = vmatpush1.msra.mxu0 %v25
    %1719 = vmatprep.subr.mxu0 0.0
    %1720 = vmatpush1.msra.mxu0 %v26
    %1721 = vmatprep.subr.mxu0 0.0
    %1722 = vmatpush1.msra.mxu0 %v27
    %1723 = vmatprep.subr.mxu0 0.0
    %1724 = vmatpush1.msra.mxu0 %v28
    %1725 = vmatprep.subr.mxu0 0.0
    %1726 = vmatpush1.msra.mxu0 %v29
    %1727 = vmatprep.subr.mxu0 0.0
    %1728 = vmatpush1.msra.mxu0 %v30
    %1729 = vmatprep.subr.mxu0 0.0
    %1730 = vmatpush1.msra.mxu0 %v31
    %1731 = vmatprep.subr.mxu0 0.0
    %1732 = vmatpush1.msra.mxu0 %v32
    %1733 = vmatprep.subr.mxu0 0.0
    %1734 = vmatpush1.msra.mxu0 %v33
    %1735 = vmatprep.subr.mxu0 0.0
    %1736 = vmatpush1.msra.mxu0 %v34
    %1737 = vmatprep.subr.mxu0 0.0
    %1738 = vmatpush1.msra.mxu0 %v35
    %1739 = vmatprep.subr.mxu0 0.0
    %1740 = vmatpush1.msra.mxu0 %v36
    %1741 = vmatprep.subr.mxu0 0.0
    %1742 = vmatpush1.msra.mxu0 0.0
    %1743 = vmatprep.subr.mxu0 0.0
    %1744 = vmatpush1.msra.mxu0 0.0
    %1745 = vmatprep.subr.mxu0 0.0
    %1746 = vmatpush1.msra.mxu0 0.0
    %1747 = vmatprep.subr.mxu0 0.0
    %1748 = vmatpush1.msra.mxu0 0.0
    %1749 = vmatprep.subr.mxu0 0.0
    %1750 = vmatpush1.msra.mxu0 0.0
    %1751 = vmatprep.subr.mxu0 0.0
    %1752 = vmatpush1.msra.mxu0 0.0
    %1753 = vmatprep.subr.mxu0 0.0
    %1754 = vmatpush1.msra.mxu0 0.0
    %1755 = vmatprep.subr.mxu0 0.0
    %1756 = vmatpush1.msra.mxu0 0.0
    %1757 = vmatprep.subr.mxu0 0.0
    %1758 = vmatpush1.msra.mxu0 0.0
    %1759 = vmatprep.subr.mxu0 0.0
    %1760 = vmatpush1.msra.mxu0 0.0
    %1761 = vmatprep.subr.mxu0 0.0
    %1762 = vmatpush1.msra.mxu0 0.0
    %1763 = vmatprep.subr.mxu0 0.0
    %1764 = vmatpush1.msra.mxu0 0.0
    %1765 = vmatprep.subr.mxu0 0.0
    %1766 = vmatpush1.msra.mxu0 0.0
    %1767 = vmatprep.subr.mxu0 0.0
    %1768 = vmatpush1.msra.mxu0 0.0
    %1769 = vmatprep.subr.mxu0 0.0
    %1770 = vmatpush1.msra.mxu0 0.0
    %1771 = vmatprep.subr.mxu0 0.0
    %1772 = vmatpush1.msra.mxu0 0.0
    %1773 = vmatprep.mubr.f32.mxu0 0.0
    %1774 = vmatmul.mubr.f32.gmra.mrb[0].mxu0 %v1703
    %v1775 = vpop.f32.mrb[0].mxu0
    %v1776 = vadd.f32 %v1708, %v1775
    %v1777 = vpop.f32.mrb[0].mxu0
    %1778 = vmatprep.mubr.f32.mxu0 0.0
    %1779 = vmatmul.mubr.f32.gmra.mrb[0].mxu0 %v1704
    %v1780 = vpop.f32.mrb[0].mxu0
    %v1781 = vadd.f32 %v1708, %v1780
    %v1782 = vpop.f32.mrb[0].mxu0
    %1783 = vdwg.mxu0
    %v1784 = vadd.f32 %v1776, %v1616
    %v1785 = vadd.f32 %v1781, %v1617
    %v1786 = vsel %vm1489, %v1784, 0.0
    %1787 = vadd.xlane.f32.xlu0 %v1786
    %v1788 = vpop.xlane.xlu0 %1787
    %v1789 = vsel %vm1489, %v1785, 0.0
    %1790 = vadd.xlane.f32.xlu0 %v1789
    %v1791 = vpop.xlane.xlu0 %1790
    %v1792 = vmul.f32 %v1788, %v1585
    %v1793 = vmul.f32 %v1791, %v1585
    %v1794 = vsub.f32 %v1784, %v1792
    %v1795 = vsub.f32 %v1785, %v1793
    %v1796 = vmul.f32 %v1794, %v1794
    %v1797 = vmul.f32 %v1795, %v1795
    %v1798 = vsel %vm1489, %v1796, 0.0
    %1799 = vadd.xlane.f32.xlu0 %v1798
    %v1800 = vpop.xlane.xlu0 %1799
    %v1801 = vsel %vm1489, %v1797, 0.0
    %1802 = vadd.xlane.f32.xlu0 %v1801
    %v1803 = vpop.xlane.xlu0 %1802
    %v1804 = vmul.f32 %v1800, %v1585
    %v1805 = vmul.f32 %v1803, %v1585
    %v1806 = vadd.f32 %v1804, 1e-05
    %v1807 = vadd.f32 %v1805, 1e-05
    %v1808 = vrsqrt.pop %v1806
    %v1809 = vrsqrt.pop %v1807
    %v1810 = vmul.f32 %v1794, %v1808
    %v1811 = vmul.f32 %v1795, %v1809
    %v1812 = vlaneseq
    %v1813 = vshrl.u32 %v1812, 7
    %v1814 = vsub.s32 5, %v1813
    %v1815 = vrot.slane %v41, %v1814
    %v1816 = vmul.f32 %v1810, %v1815
    %v1817 = vmul.f32 %v1811, %v1815
    %v1818 = vlaneseq
    %v1819 = vshrl.u32 %v1818, 7
    %v1820 = vsub.s32 6, %v1819
    %v1821 = vrot.slane %v41, %v1820
    %v1822 = vadd.f32 %v1816, %v1821
    %v1823 = vadd.f32 %v1817, %v1821
    %1824 = vst.msk [vmem:[#allocation2] sm:$0xff] %vm1489, %v1822
    %1825 = vst.msk [vmem:[#allocation2 + $0x8] sm:$0xff] %vm1489, %v1823
    // Predicated region
    $region14: #{transformer_block.1} parent=1 // pred_check
      _
    $region15: #{transformer_block.1} parent=1 // pred_check_branch
      %1827 = sbr.rel (0) target = $region17
    $region16: #{transformer_block.1} parent=1 // pred_region
      %s1829 = ssub.s32 256, 256
      %1830 = vsyncadd [#allocation3], %s1829
      %s1831 = sshll.u32 [#allocation2], 4
      %s1832 = int_to_ptr.vmem [resolvable:$true] %s1831
      %1837 = dma.vmem_to_hbm [thread:$0]  %s1832, 256, %s3, [#allocation3], 128, 128, 8
    $region17: #{transformer_block.1} parent=1 // pred_fallthru
      _
    // Predicated region
    $region18: #{transformer_block.1} parent=1 // pred_check
      _
    $region19: #{transformer_block.1} parent=1 // pred_check_branch
      %1839 = sbr.rel (0) target = $region21
    $region20: #{transformer_block.1} parent=1 // pred_region
      %1840 = dma.done [#allocation3], 256
    $region21: #{transformer_block.1} parent=1 // pred_fallthru
      _
    %1841 = vsyncpa [#allocation3], 1

</llo_original>
